<compile_context>
chip_gen: v6e
topology: v6e:2x2x1
jax: 0.10.0
libtpu: 0.0.40
codegen_flags: <defaults>
</compile_context>

<pallas_src>
import functools

import jax
import jax.numpy as jnp
from jax import lax
from jax.experimental import pallas as pl
from jax.experimental.pallas import tpu as pltpu


# -----------------------------------------------------------------------------
# Shared math
# -----------------------------------------------------------------------------
def _layer_norm(v, gamma, beta, eps=1e-5):
    # Matches torch.nn.LayerNorm: biased variance, eps inside the sqrt.
    mu = jnp.mean(v, axis=-1, keepdims=True)
    var = jnp.mean((v - mu) ** 2, axis=-1, keepdims=True)
    return (v - mu) * jax.lax.rsqrt(var + eps) * gamma + beta


# -----------------------------------------------------------------------------
# Kernel 1: all transformer blocks, activation resident in VMEM across layers
# grid = (NB, L); batch folded into the block; weights indexed by layer only.
# -----------------------------------------------------------------------------
def transformer_layers_kernel(num_heads, bblk,
                              x_ref,        # (Bblk, T, C)  f32 embeddings
                              wqkv_ref,     # (1, C, 3C)    bf16 [Wq.T*scale | Wk.T | Wv.T]
                              wo_ref,       # (1, C, C)     bf16 Wo.T
                              w1_ref,       # (1, C, 4C)    bf16 W1.T
                              w2_ref,       # (1, 4C, C)    bf16 W2.T
                              psm_ref,      # (1, 6, C)     f32 [ln1_g,ln1_b,ln2_g,ln2_b,bo,b2]
                              b1_ref,       # (1, 1, 4C)    f32
                              out_ref,      # (Bblk, T, C)  f32 post-blocks activation
                              x_scr):       # VMEM (Bblk*T, C) f32 resident activation
    l = pl.program_id(1)
    num_layers = pl.num_programs(1)
    bf16 = jnp.bfloat16

    T = x_ref.shape[1]
    C = x_ref.shape[2]
    H = num_heads
    D = C // H
    BT = bblk * T

    @pl.when(l == 0)
    def _():
        x_scr[...] = x_ref[...].reshape(BT, C)

    x = x_scr[...]                                   # (BT, C) f32

    psm = psm_ref[0]                                 # (6, C)
    ln1_g, ln1_b = psm[0:1], psm[1:2]
    ln2_g, ln2_b = psm[2:3], psm[3:4]
    b_o, b_2 = psm[4:5], psm[5:6]

    # ---- LN1 + multi-head causal self-attention (1/sqrt(D) folded into Wq) ----
    h = _layer_norm(x, ln1_g, ln1_b)
    qkv = jnp.dot(h.astype(bf16), wqkv_ref[0],
                  preferred_element_type=jnp.float32)             # (BT, 3C) f32
    q = qkv[:, 0:C]
    k = qkv[:, C:2 * C]
    v = qkv[:, 2 * C:3 * C]

    # additive causal mask built in-kernel (cheap VPU work, no VMEM residency)
    row = lax.broadcasted_iota(jnp.int32, (T, T), 0)
    col = lax.broadcasted_iota(jnp.int32, (T, T), 1)
    bias = jnp.where(col <= row, 0.0, -1e30).astype(jnp.float32)  # (T, T)

    # TODO(synk): for large T, replace the materialized (H,T,T) score tensor
    # with a KV-tiled online-softmax (flash-style) inner loop.
    o_parts = []
    for b in range(bblk):        # bblk is tiny (1-2) -> unrolled at trace time
        qb = q[b * T:(b + 1) * T, :].reshape(T, H, D)
        kb = k[b * T:(b + 1) * T, :].reshape(T, H, D)
        vb = v[b * T:(b + 1) * T, :].reshape(T, H, D)
        qh = pltpu.einshape("thd->htd", qb).astype(bf16)          # (H, T, D)
        kh = pltpu.einshape("thd->htd", kb).astype(bf16)
        vh = pltpu.einshape("thd->htd", vb).astype(bf16)

        s = jnp.einsum('htd,hsd->hts', qh, kh,
                       preferred_element_type=jnp.float32)        # (H, T, T)
        s = s + bias[None, :, :]
        m = jnp.max(s, axis=-1, keepdims=True)
        p = jnp.exp(s - m)
        p = p / jnp.sum(p, axis=-1, keepdims=True)                # exact softmax
        oh = jnp.einsum('hts,hsd->htd', p.astype(bf16), vh,
                        preferred_element_type=jnp.float32)       # (H, T, D)
        o_parts.append(pltpu.einshape("htd->thd", oh).reshape(T, C))
    o = o_parts[0] if bblk == 1 else jnp.concatenate(o_parts, axis=0)  # (BT, C)

    attn = jnp.dot(o.astype(bf16), wo_ref[0],
                   preferred_element_type=jnp.float32) + b_o
    x = x + attn

    # ---- LN2 + FFN ----
    # TODO(synk): at large C, add a grid axis over the 4C hidden dim with an
    # f32 accumulator scratch so the W1/W2 slabs need not be fully VMEM-resident.
    h2 = _layer_norm(x, ln2_g, ln2_b)
    f = jnp.dot(h2.astype(bf16), w1_ref[0],
                preferred_element_type=jnp.float32) + b1_ref[0]
    f = jnp.maximum(f, 0.0)
    f = jnp.dot(f.astype(bf16), w2_ref[0],
                preferred_element_type=jnp.float32) + b_2
    x = x + f

    x_scr[...] = x                                   # carry to next layer

    @pl.when(l == num_layers - 1)
    def _():
        out_ref[...] = x.reshape(bblk, T, C)


# -----------------------------------------------------------------------------
# Kernel 2: LM head (final LayerNorm + vocab projection), tiled over vocab
# -----------------------------------------------------------------------------
def lm_head_kernel(x_ref,      # (B, T, C)   f32
                   lnf_ref,    # (2, C)      f32 [lnf_g, lnf_b]
                   wp_ref,     # (C, TV)     bf16 Wproj.T tile
                   bp_ref,     # (1, TV)     f32
                   out_ref):   # (B, T, TV)  f32 logits tile
    B, T, C = x_ref.shape
    TV = out_ref.shape[2]
    x = x_ref[...].reshape(B * T, C)
    h = _layer_norm(x, lnf_ref[0:1], lnf_ref[1:2])
    logits = jnp.dot(h.astype(jnp.bfloat16), wp_ref[...],
                     preferred_element_type=jnp.float32) + bp_ref[...]
    out_ref[...] = logits.reshape(B, T, TV)


# -----------------------------------------------------------------------------
# Wrappers
# -----------------------------------------------------------------------------
def _choose_vocab_tile(vpad, max_tile=2048):
    tile = 128
    for cand in range(128, min(vpad, max_tile) + 1, 128):
        if vpad % cand == 0:
            tile = cand
    return tile


def transformer_layers_pallas(x_emb, pk, num_heads, batch_blocks=1):
    B, T, C = x_emb.shape
    assert B % batch_blocks == 0
    bblk = B // batch_blocks
    L = pk['w_qkv'].shape[0]
    C4 = pk['w_1'].shape[2]

    kernel = functools.partial(transformer_layers_kernel, num_heads, bblk)

    # explicit VMEM budget: per-layer bf16 weight slab + small params + I/O
    # blocks (double-buffered) + resident activation scratch, with margin.
    wbytes = (C * 3 * C + C * C + C * C4 + C4 * C) * 2 + (6 * C + C4) * 4
    iobytes = 2 * bblk * T * C * 4
    est = 2 * (wbytes + iobytes) + bblk * T * C * 4
    vmem_limit = int(max(16 << 20, min(64 << 20, 2 * est + (8 << 20))))

    return pl.pallas_call(
        kernel,
        out_shape=jax.ShapeDtypeStruct((B, T, C), jnp.float32),
        grid=(batch_blocks, L),
        in_specs=[
            pl.BlockSpec((bblk, T, C),   lambda nb, l: (nb, 0, 0)),  # embeddings
            pl.BlockSpec((1, C, 3 * C),  lambda nb, l: (l, 0, 0)),   # Wqkv.T
            pl.BlockSpec((1, C, C),      lambda nb, l: (l, 0, 0)),   # Wo.T
            pl.BlockSpec((1, C, C4),     lambda nb, l: (l, 0, 0)),   # W1.T
            pl.BlockSpec((1, C4, C),     lambda nb, l: (l, 0, 0)),   # W2.T
            pl.BlockSpec((1, 6, C),      lambda nb, l: (l, 0, 0)),   # LN/bias slab
            pl.BlockSpec((1, 1, C4),     lambda nb, l: (l, 0, 0)),   # b1
        ],
        out_specs=pl.BlockSpec((bblk, T, C), lambda nb, l: (nb, 0, 0)),
        scratch_shapes=[pltpu.VMEM((bblk * T, C), jnp.float32)],
        compiler_params=pltpu.CompilerParams(
            dimension_semantics=("parallel", "arbitrary"),
            vmem_limit_bytes=vmem_limit),
    )(x_emb, pk['w_qkv'], pk['w_o'], pk['w_1'], pk['w_2'], pk['psm'], pk['b1'])


def lm_head_pallas(x, pk):
    B, T, C = x.shape
    Vpad = pk['wp'].shape[1]
    TV = _choose_vocab_tile(Vpad)
    NV = Vpad // TV

    est = 2 * (C * TV * 2 + TV * 4 + B * T * C * 4 + B * T * TV * 4 + 2 * C * 4)
    vmem_limit = int(max(16 << 20, min(64 << 20, 2 * est + (8 << 20))))

    return pl.pallas_call(
        lm_head_kernel,
        out_shape=jax.ShapeDtypeStruct((B, T, Vpad), jnp.float32),
        grid=(NV,),
        in_specs=[
            pl.BlockSpec((B, T, C),  lambda v: (0, 0, 0)),   # activations
            pl.BlockSpec((2, C),     lambda v: (0, 0)),      # lnf gamma/beta
            pl.BlockSpec((C, TV),    lambda v: (0, v)),      # Wproj.T tile
            pl.BlockSpec((1, TV),    lambda v: (0, v)),      # bproj tile
        ],
        out_specs=pl.BlockSpec((B, T, TV), lambda v: (0, 0, v)),
        compiler_params=pltpu.CompilerParams(
            dimension_semantics=("parallel",),
            vmem_limit_bytes=vmem_limit),
    )(x, pk['lnf'], pk['wp'], pk['bp'])


# -----------------------------------------------------------------------------
# One-time parameter packing (hoisted out of the forward; do at model init)
# -----------------------------------------------------------------------------
def pack_params(params, num_heads):
    blocks = params['blocks']
    C = params['tok_emb'].shape[1]
    D = C // num_heads
    scale = 1.0 / (D ** 0.5)
    bf = lambda a: a.astype(jnp.bfloat16)

    # attention scale folded into Wq (q/k/v Linear layers have no bias)
    w_qkv = jnp.stack([jnp.concatenate([b['wq'].T * scale, b['wk'].T, b['wv'].T],
                                       axis=1) for b in blocks])    # (L, C, 3C)
    w_o = jnp.stack([b['wo'].T for b in blocks])                    # (L, C, C)
    w_1 = jnp.stack([b['w1'].T for b in blocks])                    # (L, C, 4C)
    w_2 = jnp.stack([b['w2'].T for b in blocks])                    # (L, 4C, C)
    psm = jnp.stack([jnp.concatenate([b['ln1_g'], b['ln1_b'],
                                      b['ln2_g'], b['ln2_b'],
                                      b['bo'], b['b2']], axis=0)
                     for b in blocks])                              # (L, 6, C)
    b1s = jnp.stack([b['b1'] for b in blocks])                      # (L, 1, 4C)

    lnf = jnp.concatenate([params['lnf_g'], params['lnf_b']], axis=0)   # (2, C)

    V = params['w_proj'].shape[0]
    Vpad = ((V + 127) // 128) * 128                                 # lane-dense logits
    wp = jnp.pad(params['w_proj'].T, ((0, 0), (0, Vpad - V)))       # (C, Vpad)
    bp = jnp.pad(params['b_proj'], ((0, 0), (0, Vpad - V)))         # (1, Vpad)

    return dict(tok_emb=params['tok_emb'].astype(jnp.float32),
                pos_emb=params['pos_emb'].astype(jnp.float32),
                w_qkv=bf(w_qkv), w_o=bf(w_o), w_1=bf(w_1), w_2=bf(w_2),
                psm=psm.astype(jnp.float32), b1=b1s.astype(jnp.float32),
                lnf=lnf.astype(jnp.float32), wp=bf(wp),
                bp=bp.astype(jnp.float32), vocab=V, vpad=Vpad)
    # TODO(synk): optional int8 (v5e/v6e) or fp8 (v7x) weight quantization with
    # per-output-channel scales when the profile is weight-bandwidth bound.


# -----------------------------------------------------------------------------
# Parameter init (deterministic, synthetic, PyTorch-style (out, in) layout)
# -----------------------------------------------------------------------------
def init_params(key, vocab_size, channel_dim, context_window, num_layers):
    C = channel_dim
    keys = jax.random.split(key, 4 + num_layers)

    def nrm(k, shape, scale=0.02):
        return (scale * jax.random.normal(k, shape)).astype(jnp.float32)

    params = {
        'tok_emb': nrm(keys[0], (vocab_size, C)),
        'pos_emb': nrm(keys[1], (context_window, C)),
        'lnf_g': jnp.ones((1, C), jnp.float32),
        'lnf_b': jnp.zeros((1, C), jnp.float32),
        'w_proj': nrm(keys[2], (vocab_size, C)),
        'b_proj': jnp.zeros((1, vocab_size), jnp.float32),
        'blocks': [],
    }
    for l in range(num_layers):
        lk = jax.random.split(keys[4 + l], 8)
        params['blocks'].append({
            'ln1_g': jnp.ones((1, C), jnp.float32),
            'ln1_b': jnp.zeros((1, C), jnp.float32),
            'wq': nrm(lk[0], (C, C)),
            'wk': nrm(lk[1], (C, C)),
            'wv': nrm(lk[2], (C, C)),
            'wo': nrm(lk[3], (C, C)),
            'bo': jnp.zeros((1, C), jnp.float32),
            'ln2_g': jnp.ones((1, C), jnp.float32),
            'ln2_b': jnp.zeros((1, C), jnp.float32),
            'w1': nrm(lk[4], (4 * C, C)),
            'b1': jnp.zeros((1, 4 * C), jnp.float32),
            'w2': nrm(lk[5], (C, 4 * C)),
            'b2': jnp.zeros((1, C), jnp.float32),
        })
    return params


# -----------------------------------------------------------------------------
# Forward pass (embeddings in JAX glue, blocks + LM head in two Pallas calls)
# -----------------------------------------------------------------------------
def transformer_forward(x_indices, pk, num_heads, context_window, batch_blocks=1):
    B, T = x_indices.shape
    if T > context_window:                      # truncate like the PyTorch module
        x_indices = x_indices[:, :context_window]
        T = context_window

    tok_emb = pk['tok_emb'][x_indices]                           # (B, T, C) gather
    pos_emb = pk['pos_emb'][:T]                                  # (T, C)
    x = (tok_emb + pos_emb[None, :, :]).astype(jnp.float32)

    x = transformer_layers_pallas(x, pk, num_heads, batch_blocks=batch_blocks)
    logits_padded = lm_head_pallas(x, pk)
    # TODO(synk): optional cross-entropy loss branch (targets) left in JAX-land;
    # this returns the logits-only (loss=None) path of the PyTorch forward.
    return logits_padded[:, :, :pk['vocab']]


# -----------------------------------------------------------------------------
# Pure-JAX f32 reference (sanity check against the bf16 kernel path)
# -----------------------------------------------------------------------------
def reference_forward(x_indices, params, num_heads, context_window):
    B, T = x_indices.shape
    C = params['tok_emb'].shape[1]
    H, D = num_heads, C // num_heads
    x = params['tok_emb'][x_indices] + params['pos_emb'][:T][None]
    tril = jnp.tril(jnp.ones((T, T), dtype=bool))
    for blk in params['blocks']:
        h = _layer_norm(x, blk['ln1_g'], blk['ln1_b'])
        Q = (h @ blk['wq'].T).reshape(B, T, H, D).transpose(0, 2, 1, 3)
        K = (h @ blk['wk'].T).reshape(B, T, H, D).transpose(0, 2, 1, 3)
        V = (h @ blk['wv'].T).reshape(B, T, H, D).transpose(0, 2, 1, 3)
        s = (Q @ jnp.swapaxes(K, -1, -2)) / (D ** 0.5)
        s = jnp.where(tril[None, None], s, -jnp.inf)
        p = jax.nn.softmax(s, axis=-1)
        o = (p @ V).transpose(0, 2, 1, 3).reshape(B, T, C)
        x = x + o @ blk['wo'].T + blk['bo']
        h2 = _layer_norm(x, blk['ln2_g'], blk['ln2_b'])
        f = jnp.maximum(h2 @ blk['w1'].T + blk['b1'], 0.0)
        x = x + f @ blk['w2'].T + blk['b2']
    hf = _layer_norm(x, params['lnf_g'], params['lnf_b'])
    return hf @ params['w_proj'].T + params['b_proj']


# -----------------------------------------------------------------------------
if __name__ == "__main__":
    VOCAB = 64
    CHANNEL = 32
    CONTEXT = 8
    NUM_HEADS = 4
    NUM_LAYERS = 2
    B, T = 2, 8

    key = jax.random.PRNGKey(0)
    pkey, xkey = jax.random.split(key)
    params = init_params(pkey, VOCAB, CHANNEL, CONTEXT, NUM_LAYERS)
    x_indices = jax.random.randint(xkey, (B, T), 0, VOCAB, dtype=jnp.int32)

    # pack once at init (hoisted out of the forward per the perf review)
    pk = pack_params(params, NUM_HEADS)

    # batch_blocks=1 -> weights DMA'd once per layer; set 2 on v7x for 2 TCs.
    logits = transformer_forward(x_indices, pk, NUM_HEADS, CONTEXT, batch_blocks=1)
    logits = jax.block_until_ready(logits)

    assert logits.shape == (B, T, VOCAB), logits.shape
    assert bool(jnp.all(jnp.isfinite(logits)))

    # sanity check vs. the f32 JAX reference (kernel uses bf16 on the MXU path)
    ref = reference_forward(x_indices, params, NUM_HEADS, CONTEXT)
    max_err = float(jnp.max(jnp.abs(logits - ref)))
    assert max_err < 5e-2, f"max abs err vs reference: {max_err}"

    print("KERNEL_OK")
</pallas_src>

<mosaic_0001>
module attributes {stable_mosaic.version = 11 : i64} {
  func.func @transformer_layers_kernel(%arg0: i32, %arg1: i32, %arg2: memref<2x8x32xf32, #tpu.memory_space<vmem>>, %arg3: memref<1x32x96xbf16, #tpu.memory_space<vmem>>, %arg4: memref<1x32x32xbf16, #tpu.memory_space<vmem>>, %arg5: memref<1x32x128xbf16, #tpu.memory_space<vmem>>, %arg6: memref<1x128x32xbf16, #tpu.memory_space<vmem>>, %arg7: memref<1x6x32xf32, #tpu.memory_space<vmem>>, %arg8: memref<1x1x128xf32, #tpu.memory_space<vmem>>, %arg9: memref<2x8x32xf32, #tpu.memory_space<vmem>>, %arg10: memref<16x32xf32, #tpu.memory_space<vmem>>) attributes {dimension_semantics = [#tpu.dimension_semantics<parallel>, #tpu.dimension_semantics<arbitrary>], iteration_bounds = array<i64: 1, 2>, scalar_prefetch = 0 : i64, scratch_operands = 1 : i64, tpu.core_type = #tpu.core_type<tc>, window_params = [{transform_indices = @transform_0, window_bounds = array<i64: 2, 8, 32>}, {transform_indices = @transform_1, window_bounds = array<i64: 1, 32, 96>}, {transform_indices = @transform_2, window_bounds = array<i64: 1, 32, 32>}, {transform_indices = @transform_3, window_bounds = array<i64: 1, 32, 128>}, {transform_indices = @transform_4, window_bounds = array<i64: 1, 128, 32>}, {transform_indices = @transform_5, window_bounds = array<i64: 1, 6, 32>}, {transform_indices = @transform_6, window_bounds = array<i64: 1, 1, 128>}, {transform_indices = @transform_7, window_bounds = array<i64: 2, 8, 32>}]} {
    %c0_i32 = arith.constant 0 : i32
    %0 = arith.cmpi eq, %arg1, %c0_i32 : i32
    %1 = arith.extui %0 : i1 to i32
    %c0_i32_0 = arith.constant 0 : i32
    %2 = arith.cmpi ne, %1, %c0_i32_0 : i32
    scf.if %2 {
      %c0_47 = arith.constant 0 : index
      %c0_48 = arith.constant 0 : index
      %c0_49 = arith.constant 0 : index
      %156 = vector.load %arg2[%c0_47, %c0_48, %c0_49] : memref<2x8x32xf32, #tpu.memory_space<vmem>>, vector<2x8x32xf32>
      %157 = vector.shape_cast %156 : vector<2x8x32xf32> to vector<16x32xf32>
      %c0_50 = arith.constant 0 : index
      %c0_51 = arith.constant 0 : index
      %158 = vector.load %arg10[%c0_50, %c0_51] : memref<16x32xf32, #tpu.memory_space<vmem>>, vector<16x32xf32>
      tpu.vector_store %arg10[%c0_50, %c0_51], %157 {strides = array<i32>} : memref<16x32xf32, #tpu.memory_space<vmem>>, vector<16x32xf32>,
    } else {
    }
    %c0 = arith.constant 0 : index
    %c0_1 = arith.constant 0 : index
    %3 = vector.load %arg10[%c0, %c0_1] : memref<16x32xf32, #tpu.memory_space<vmem>>, vector<16x32xf32>
    %c0_2 = arith.constant 0 : index
    %c0_3 = arith.constant 0 : index
    %c0_4 = arith.constant 0 : index
    %4 = vector.load %arg7[%c0_2, %c0_3, %c0_4] : memref<1x6x32xf32, #tpu.memory_space<vmem>>, vector<1x6x32xf32>
    %5 = vector.shape_cast %4 : vector<1x6x32xf32> to vector<6x32xf32>
    %6 = vector.extract_strided_slice %5 {offsets = [0, 0], sizes = [1, 32], strides = [1, 1]} : vector<6x32xf32> to vector<1x32xf32>
    %7 = vector.extract_strided_slice %5 {offsets = [1, 0], sizes = [1, 32], strides = [1, 1]} : vector<6x32xf32> to vector<1x32xf32>
    %8 = vector.extract_strided_slice %5 {offsets = [2, 0], sizes = [1, 32], strides = [1, 1]} : vector<6x32xf32> to vector<1x32xf32>
    %9 = vector.extract_strided_slice %5 {offsets = [3, 0], sizes = [1, 32], strides = [1, 1]} : vector<6x32xf32> to vector<1x32xf32>
    %10 = vector.extract_strided_slice %5 {offsets = [4, 0], sizes = [1, 32], strides = [1, 1]} : vector<6x32xf32> to vector<1x32xf32>
    %11 = vector.extract_strided_slice %5 {offsets = [5, 0], sizes = [1, 32], strides = [1, 1]} : vector<6x32xf32> to vector<1x32xf32>
    %cst = arith.constant dense<0.000000e+00> : vector<16xf32>
    %12 = vector.multi_reduction <add>, %3, %cst [1] : vector<16x32xf32> to vector<16xf32>
    %13 = vector.shape_cast %12 : vector<16xf32> to vector<16x1xf32>
    %cst_5 = arith.constant 3.200000e+01 : f32
    %14 = vector.broadcast %cst_5 : f32 to vector<16x1xf32>
    %15 = arith.divf %13, %14 : vector<16x1xf32>
    %16 = vector.broadcast %15 : vector<16x1xf32> to vector<16x32xf32>
    %17 = arith.subf %3, %16 : vector<16x32xf32>
    %18 = arith.mulf %17, %17 : vector<16x32xf32>
    %cst_6 = arith.constant dense<0.000000e+00> : vector<16xf32>
    %19 = vector.multi_reduction <add>, %18, %cst_6 [1] : vector<16x32xf32> to vector<16xf32>
    %20 = vector.shape_cast %19 : vector<16xf32> to vector<16x1xf32>
    %cst_7 = arith.constant 3.200000e+01 : f32
    %21 = vector.broadcast %cst_7 : f32 to vector<16x1xf32>
    %22 = arith.divf %20, %21 : vector<16x1xf32>
    %23 = vector.broadcast %15 : vector<16x1xf32> to vector<16x32xf32>
    %24 = arith.subf %3, %23 : vector<16x32xf32>
    %cst_8 = arith.constant 9.99999974E-6 : f32
    %25 = vector.broadcast %cst_8 : f32 to vector<16x1xf32>
    %26 = arith.addf %22, %25 : vector<16x1xf32>
    %27 = math.rsqrt %26 : vector<16x1xf32>
    %28 = vector.broadcast %27 : vector<16x1xf32> to vector<16x32xf32>
    %29 = arith.mulf %24, %28 : vector<16x32xf32>
    %30 = vector.broadcast %6 : vector<1x32xf32> to vector<16x32xf32>
    %31 = arith.mulf %29, %30 : vector<16x32xf32>
    %32 = vector.broadcast %7 : vector<1x32xf32> to vector<16x32xf32>
    %33 = arith.addf %31, %32 : vector<16x32xf32>
    %34 = arith.truncf %33 : vector<16x32xf32> to vector<16x32xbf16>
    %c0_9 = arith.constant 0 : index
    %c0_10 = arith.constant 0 : index
    %c0_11 = arith.constant 0 : index
    %35 = vector.load %arg3[%c0_9, %c0_10, %c0_11] : memref<1x32x96xbf16, #tpu.memory_space<vmem>>, vector<1x32x96xbf16>
    %36 = vector.shape_cast %35 : vector<1x32x96xbf16> to vector<32x96xbf16>
    %cst_12 = arith.constant dense<0.000000e+00> : vector<16x96xf32>
    %37 = tpu.matmul %34, %36, %cst_12 {dimension_numbers = #tpu.dot_dimension_numbers<[1], [0], [0], [1], [0, 0, 1, 1], [], []>} : vector<16x32xbf16>, vector<32x96xbf16>, vector<16x96xf32> -> vector<16x96xf32>
    %38 = vector.extract_strided_slice %37 {offsets = [0, 0], sizes = [16, 32], strides = [1, 1]} : vector<16x96xf32> to vector<16x32xf32>
    %39 = vector.extract_strided_slice %37 {offsets = [0, 32], sizes = [16, 32], strides = [1, 1]} : vector<16x96xf32> to vector<16x32xf32>
    %40 = vector.extract_strided_slice %37 {offsets = [0, 64], sizes = [16, 32], strides = [1, 1]} : vector<16x96xf32> to vector<16x32xf32>
    %41 = tpu.iota {dimensions = array<i32: 0>} : vector<8x8xi32>
    %42 = tpu.iota {dimensions = array<i32: 1>} : vector<8x8xi32>
    %43 = arith.cmpi sle, %42, %41 : vector<8x8xi32>
    %cst_13 = arith.constant 0.000000e+00 : f32
    %cst_14 = arith.constant -1.000000e+30 : f32
    %44 = vector.broadcast %cst_13 : f32 to vector<8x8xf32>
    %45 = vector.broadcast %cst_14 : f32 to vector<8x8xf32>
    %46 = arith.select %43, %44, %45 : vector<8x8xi1>, vector<8x8xf32>
    %47 = vector.extract_strided_slice %38 {offsets = [0, 0], sizes = [8, 32], strides = [1, 1]} : vector<16x32xf32> to vector<8x32xf32>
    %48 = vector.shape_cast %47 : vector<8x32xf32> to vector<8x4x8xf32>
    %49 = vector.extract_strided_slice %39 {offsets = [0, 0], sizes = [8, 32], strides = [1, 1]} : vector<16x32xf32> to vector<8x32xf32>
    %50 = vector.shape_cast %49 : vector<8x32xf32> to vector<8x4x8xf32>
    %51 = vector.extract_strided_slice %40 {offsets = [0, 0], sizes = [8, 32], strides = [1, 1]} : vector<16x32xf32> to vector<8x32xf32>
    %52 = vector.shape_cast %51 : vector<8x32xf32> to vector<8x4x8xf32>
    %53 = tpu.transpose %48, [1, 0, 2] : vector<8x4x8xf32> -> vector<4x8x8xf32>
    %54 = arith.truncf %53 : vector<4x8x8xf32> to vector<4x8x8xbf16>
    %55 = tpu.transpose %50, [1, 0, 2] : vector<8x4x8xf32> -> vector<4x8x8xf32>
    %56 = arith.truncf %55 : vector<4x8x8xf32> to vector<4x8x8xbf16>
    %57 = tpu.transpose %52, [1, 0, 2] : vector<8x4x8xf32> -> vector<4x8x8xf32>
    %58 = arith.truncf %57 : vector<4x8x8xf32> to vector<4x8x8xbf16>
    "tpu.trace_start"() <{level = 10 : i32, message = "htd,hsd->hts"}> : () -> ()
    %cst_15 = arith.constant dense<0.000000e+00> : vector<4x8x8xf32>
    %59 = tpu.matmul %54, %56, %cst_15 {dimension_numbers = #tpu.dot_dimension_numbers<[2], [2], [1], [1], [0, 0, 0, 1, 1, 1], [0], [0]>} : vector<4x8x8xbf16>, vector<4x8x8xbf16>, vector<4x8x8xf32> -> vector<4x8x8xf32>
    "tpu.trace_stop"() : () -> ()
    %60 = vector.shape_cast %46 : vector<8x8xf32> to vector<1x8x8xf32>
    %61 = vector.broadcast %60 : vector<1x8x8xf32> to vector<4x8x8xf32>
    %62 = arith.addf %59, %61 : vector<4x8x8xf32>
    %cst_16 = arith.constant dense<0xFF800000> : vector<4x8xf32>
    %63 = vector.multi_reduction <maximumf>, %62, %cst_16 [2] : vector<4x8x8xf32> to vector<4x8xf32>
    %64 = vector.shape_cast %63 : vector<4x8xf32> to vector<4x8x1xf32>
    %65 = vector.broadcast %64 : vector<4x8x1xf32> to vector<4x8x8xf32>
    %66 = arith.subf %62, %65 : vector<4x8x8xf32>
    %67 = math.exp %66 : vector<4x8x8xf32>
    %cst_17 = arith.constant dense<0.000000e+00> : vector<4x8xf32>
    %68 = vector.multi_reduction <add>, %67, %cst_17 [2] : vector<4x8x8xf32> to vector<4x8xf32>
    %69 = vector.shape_cast %68 : vector<4x8xf32> to vector<4x8x1xf32>
    %70 = vector.broadcast %69 : vector<4x8x1xf32> to vector<4x8x8xf32>
    %71 = arith.divf %67, %70 : vector<4x8x8xf32>
    %72 = arith.truncf %71 : vector<4x8x8xf32> to vector<4x8x8xbf16>
    "tpu.trace_start"() <{level = 10 : i32, message = "hts,hsd->htd"}> : () -> ()
    %cst_18 = arith.constant dense<0.000000e+00> : vector<4x8x8xf32>
    %73 = tpu.matmul %72, %58, %cst_18 {dimension_numbers = #tpu.dot_dimension_numbers<[2], [1], [1], [2], [0, 0, 0, 1, 1, 2], [0], [0]>} : vector<4x8x8xbf16>, vector<4x8x8xbf16>, vector<4x8x8xf32> -> vector<4x8x8xf32>
    "tpu.trace_stop"() : () -> ()
    %74 = tpu.transpose %73, [1, 0, 2] : vector<4x8x8xf32> -> vector<8x4x8xf32>
    %75 = vector.shape_cast %74 : vector<8x4x8xf32> to vector<8x32xf32>
    %76 = vector.extract_strided_slice %38 {offsets = [8, 0], sizes = [8, 32], strides = [1, 1]} : vector<16x32xf32> to vector<8x32xf32>
    %77 = vector.shape_cast %76 : vector<8x32xf32> to vector<8x4x8xf32>
    %78 = vector.extract_strided_slice %39 {offsets = [8, 0], sizes = [8, 32], strides = [1, 1]} : vector<16x32xf32> to vector<8x32xf32>
    %79 = vector.shape_cast %78 : vector<8x32xf32> to vector<8x4x8xf32>
    %80 = vector.extract_strided_slice %40 {offsets = [8, 0], sizes = [8, 32], strides = [1, 1]} : vector<16x32xf32> to vector<8x32xf32>
    %81 = vector.shape_cast %80 : vector<8x32xf32> to vector<8x4x8xf32>
    %82 = tpu.transpose %77, [1, 0, 2] : vector<8x4x8xf32> -> vector<4x8x8xf32>
    %83 = arith.truncf %82 : vector<4x8x8xf32> to vector<4x8x8xbf16>
    %84 = tpu.transpose %79, [1, 0, 2] : vector<8x4x8xf32> -> vector<4x8x8xf32>
    %85 = arith.truncf %84 : vector<4x8x8xf32> to vector<4x8x8xbf16>
    %86 = tpu.transpose %81, [1, 0, 2] : vector<8x4x8xf32> -> vector<4x8x8xf32>
    %87 = arith.truncf %86 : vector<4x8x8xf32> to vector<4x8x8xbf16>
    "tpu.trace_start"() <{level = 10 : i32, message = "htd,hsd->hts"}> : () -> ()
    %cst_19 = arith.constant dense<0.000000e+00> : vector<4x8x8xf32>
    %88 = tpu.matmul %83, %85, %cst_19 {dimension_numbers = #tpu.dot_dimension_numbers<[2], [2], [1], [1], [0, 0, 0, 1, 1, 1], [0], [0]>} : vector<4x8x8xbf16>, vector<4x8x8xbf16>, vector<4x8x8xf32> -> vector<4x8x8xf32>
    "tpu.trace_stop"() : () -> ()
    %89 = vector.shape_cast %46 : vector<8x8xf32> to vector<1x8x8xf32>
    %90 = vector.broadcast %89 : vector<1x8x8xf32> to vector<4x8x8xf32>
    %91 = arith.addf %88, %90 : vector<4x8x8xf32>
    %cst_20 = arith.constant dense<0xFF800000> : vector<4x8xf32>
    %92 = vector.multi_reduction <maximumf>, %91, %cst_20 [2] : vector<4x8x8xf32> to vector<4x8xf32>
    %93 = vector.shape_cast %92 : vector<4x8xf32> to vector<4x8x1xf32>
    %94 = vector.broadcast %93 : vector<4x8x1xf32> to vector<4x8x8xf32>
    %95 = arith.subf %91, %94 : vector<4x8x8xf32>
    %96 = math.exp %95 : vector<4x8x8xf32>
    %cst_21 = arith.constant dense<0.000000e+00> : vector<4x8xf32>
    %97 = vector.multi_reduction <add>, %96, %cst_21 [2] : vector<4x8x8xf32> to vector<4x8xf32>
    %98 = vector.shape_cast %97 : vector<4x8xf32> to vector<4x8x1xf32>
    %99 = vector.broadcast %98 : vector<4x8x1xf32> to vector<4x8x8xf32>
    %100 = arith.divf %96, %99 : vector<4x8x8xf32>
    %101 = arith.truncf %100 : vector<4x8x8xf32> to vector<4x8x8xbf16>
    "tpu.trace_start"() <{level = 10 : i32, message = "hts,hsd->htd"}> : () -> ()
    %cst_22 = arith.constant dense<0.000000e+00> : vector<4x8x8xf32>
    %102 = tpu.matmul %101, %87, %cst_22 {dimension_numbers = #tpu.dot_dimension_numbers<[2], [1], [1], [2], [0, 0, 0, 1, 1, 2], [0], [0]>} : vector<4x8x8xbf16>, vector<4x8x8xbf16>, vector<4x8x8xf32> -> vector<4x8x8xf32>
    "tpu.trace_stop"() : () -> ()
    %103 = tpu.transpose %102, [1, 0, 2] : vector<4x8x8xf32> -> vector<8x4x8xf32>
    %104 = vector.shape_cast %103 : vector<8x4x8xf32> to vector<8x32xf32>
    %105 = tpu.concatenate %75, %104 in 0 : vector<8x32xf32>, vector<8x32xf32> -> vector<16x32xf32>
    %106 = arith.truncf %105 : vector<16x32xf32> to vector<16x32xbf16>
    %c0_23 = arith.constant 0 : index
    %c0_24 = arith.constant 0 : index
    %c0_25 = arith.constant 0 : index
    %107 = vector.load %arg4[%c0_23, %c0_24, %c0_25] : memref<1x32x32xbf16, #tpu.memory_space<vmem>>, vector<1x32x32xbf16>
    %108 = vector.shape_cast %107 : vector<1x32x32xbf16> to vector<32x32xbf16>
    %cst_26 = arith.constant dense<0.000000e+00> : vector<16x32xf32>
    %109 = tpu.matmul %106, %108, %cst_26 {dimension_numbers = #tpu.dot_dimension_numbers<[1], [0], [0], [1], [0, 0, 1, 1], [], []>} : vector<16x32xbf16>, vector<32x32xbf16>, vector<16x32xf32> -> vector<16x32xf32>
    %110 = vector.broadcast %10 : vector<1x32xf32> to vector<16x32xf32>
    %111 = arith.addf %109, %110 : vector<16x32xf32>
    %112 = arith.addf %3, %111 : vector<16x32xf32>
    %cst_27 = arith.constant dense<0.000000e+00> : vector<16xf32>
    %113 = vector.multi_reduction <add>, %112, %cst_27 [1] : vector<16x32xf32> to vector<16xf32>
    %114 = vector.shape_cast %113 : vector<16xf32> to vector<16x1xf32>
    %cst_28 = arith.constant 3.200000e+01 : f32
    %115 = vector.broadcast %cst_28 : f32 to vector<16x1xf32>
    %116 = arith.divf %114, %115 : vector<16x1xf32>
    %117 = vector.broadcast %116 : vector<16x1xf32> to vector<16x32xf32>
    %118 = arith.subf %112, %117 : vector<16x32xf32>
    %119 = arith.mulf %118, %118 : vector<16x32xf32>
    %cst_29 = arith.constant dense<0.000000e+00> : vector<16xf32>
    %120 = vector.multi_reduction <add>, %119, %cst_29 [1] : vector<16x32xf32> to vector<16xf32>
    %121 = vector.shape_cast %120 : vector<16xf32> to vector<16x1xf32>
    %cst_30 = arith.constant 3.200000e+01 : f32
    %122 = vector.broadcast %cst_30 : f32 to vector<16x1xf32>
    %123 = arith.divf %121, %122 : vector<16x1xf32>
    %124 = vector.broadcast %116 : vector<16x1xf32> to vector<16x32xf32>
    %125 = arith.subf %112, %124 : vector<16x32xf32>
    %cst_31 = arith.constant 9.99999974E-6 : f32
    %126 = vector.broadcast %cst_31 : f32 to vector<16x1xf32>
    %127 = arith.addf %123, %126 : vector<16x1xf32>
    %128 = math.rsqrt %127 : vector<16x1xf32>
    %129 = vector.broadcast %128 : vector<16x1xf32> to vector<16x32xf32>
    %130 = arith.mulf %125, %129 : vector<16x32xf32>
    %131 = vector.broadcast %8 : vector<1x32xf32> to vector<16x32xf32>
    %132 = arith.mulf %130, %131 : vector<16x32xf32>
    %133 = vector.broadcast %9 : vector<1x32xf32> to vector<16x32xf32>
    %134 = arith.addf %132, %133 : vector<16x32xf32>
    %135 = arith.truncf %134 : vector<16x32xf32> to vector<16x32xbf16>
    %c0_32 = arith.constant 0 : index
    %c0_33 = arith.constant 0 : index
    %c0_34 = arith.constant 0 : index
    %136 = vector.load %arg5[%c0_32, %c0_33, %c0_34] : memref<1x32x128xbf16, #tpu.memory_space<vmem>>, vector<1x32x128xbf16>
    %137 = vector.shape_cast %136 : vector<1x32x128xbf16> to vector<32x128xbf16>
    %cst_35 = arith.constant dense<0.000000e+00> : vector<16x128xf32>
    %138 = tpu.matmul %135, %137, %cst_35 {dimension_numbers = #tpu.dot_dimension_numbers<[1], [0], [0], [1], [0, 0, 1, 1], [], []>} : vector<16x32xbf16>, vector<32x128xbf16>, vector<16x128xf32> -> vector<16x128xf32>
    %c0_36 = arith.constant 0 : index
    %c0_37 = arith.constant 0 : index
    %c0_38 = arith.constant 0 : index
    %139 = vector.load %arg8[%c0_36, %c0_37, %c0_38] : memref<1x1x128xf32, #tpu.memory_space<vmem>>, vector<1x1x128xf32>
    %140 = vector.shape_cast %139 : vector<1x1x128xf32> to vector<1x128xf32>
    %141 = vector.broadcast %140 : vector<1x128xf32> to vector<16x128xf32>
    %142 = arith.addf %138, %141 : vector<16x128xf32>
    %cst_39 = arith.constant 0.000000e+00 : f32
    %143 = vector.broadcast %cst_39 : f32 to vector<16x128xf32>
    %144 = arith.maximumf %142, %143 : vector<16x128xf32>
    %145 = arith.truncf %144 : vector<16x128xf32> to vector<16x128xbf16>
    %c0_40 = arith.constant 0 : index
    %c0_41 = arith.constant 0 : index
    %c0_42 = arith.constant 0 : index
    %146 = vector.load %arg6[%c0_40, %c0_41, %c0_42] : memref<1x128x32xbf16, #tpu.memory_space<vmem>>, vector<1x128x32xbf16>
    %147 = vector.shape_cast %146 : vector<1x128x32xbf16> to vector<128x32xbf16>
    %cst_43 = arith.constant dense<0.000000e+00> : vector<16x32xf32>
    %148 = tpu.matmul %145, %147, %cst_43 {dimension_numbers = #tpu.dot_dimension_numbers<[1], [0], [0], [1], [0, 0, 1, 1], [], []>} : vector<16x128xbf16>, vector<128x32xbf16>, vector<16x32xf32> -> vector<16x32xf32>
    %149 = vector.broadcast %11 : vector<1x32xf32> to vector<16x32xf32>
    %150 = arith.addf %148, %149 : vector<16x32xf32>
    %151 = arith.addf %112, %150 : vector<16x32xf32>
    %c0_44 = arith.constant 0 : index
    %c0_45 = arith.constant 0 : index
    %152 = vector.load %arg10[%c0_44, %c0_45] : memref<16x32xf32, #tpu.memory_space<vmem>>, vector<16x32xf32>
    tpu.vector_store %arg10[%c0_44, %c0_45], %151 {strides = array<i32>} : memref<16x32xf32, #tpu.memory_space<vmem>>, vector<16x32xf32>,
    %c1_i32 = arith.constant 1 : i32
    %153 = arith.cmpi eq, %arg1, %c1_i32 : i32
    %154 = arith.extui %153 : i1 to i32
    %c0_i32_46 = arith.constant 0 : i32
    %155 = arith.cmpi ne, %154, %c0_i32_46 : i32
    scf.if %155 {
      %156 = vector.shape_cast %151 : vector<16x32xf32> to vector<2x8x32xf32>
      %c0_47 = arith.constant 0 : index
      %c0_48 = arith.constant 0 : index
      %c0_49 = arith.constant 0 : index
      %157 = vector.load %arg9[%c0_47, %c0_48, %c0_49] : memref<2x8x32xf32, #tpu.memory_space<vmem>>, vector<2x8x32xf32>
      tpu.vector_store %arg9[%c0_47, %c0_48, %c0_49], %156 {strides = array<i32>} : memref<2x8x32xf32, #tpu.memory_space<vmem>>, vector<2x8x32xf32>,
    } else {
    }
    return
  }
  func.func @transform_0(%arg0: i32, %arg1: i32) -> (i32, i32, i32) {
    %c0_i32 = arith.constant 0 : i32
    %c0_i32_0 = arith.constant 0 : i32
    %c0_i32_1 = arith.constant 0 : i32
    return %arg0, %c0_i32, %c0_i32_0 : i32, i32, i32
  }
  func.func @transform_1(%arg0: i32, %arg1: i32) -> (i32, i32, i32) {
    %c0_i32 = arith.constant 0 : i32
    %c0_i32_0 = arith.constant 0 : i32
    %c0_i32_1 = arith.constant 0 : i32
    return %arg1, %c0_i32, %c0_i32_0 : i32, i32, i32
  }
  func.func @transform_2(%arg0: i32, %arg1: i32) -> (i32, i32, i32) {
    %c0_i32 = arith.constant 0 : i32
    %c0_i32_0 = arith.constant 0 : i32
    %c0_i32_1 = arith.constant 0 : i32
    return %arg1, %c0_i32, %c0_i32_0 : i32, i32, i32
  }
  func.func @transform_3(%arg0: i32, %arg1: i32) -> (i32, i32, i32) {
    %c0_i32 = arith.constant 0 : i32
    %c0_i32_0 = arith.constant 0 : i32
    %c0_i32_1 = arith.constant 0 : i32
    return %arg1, %c0_i32, %c0_i32_0 : i32, i32, i32
  }
  func.func @transform_4(%arg0: i32, %arg1: i32) -> (i32, i32, i32) {
    %c0_i32 = arith.constant 0 : i32
    %c0_i32_0 = arith.constant 0 : i32
    %c0_i32_1 = arith.constant 0 : i32
    return %arg1, %c0_i32, %c0_i32_0 : i32, i32, i32
  }
  func.func @transform_5(%arg0: i32, %arg1: i32) -> (i32, i32, i32) {
    %c0_i32 = arith.constant 0 : i32
    %c0_i32_0 = arith.constant 0 : i32
    %c0_i32_1 = arith.constant 0 : i32
    return %arg1, %c0_i32, %c0_i32_0 : i32, i32, i32
  }
  func.func @transform_6(%arg0: i32, %arg1: i32) -> (i32, i32, i32) {
    %c0_i32 = arith.constant 0 : i32
    %c0_i32_0 = arith.constant 0 : i32
    %c0_i32_1 = arith.constant 0 : i32
    return %arg1, %c0_i32, %c0_i32_0 : i32, i32, i32
  }
  func.func @transform_7(%arg0: i32, %arg1: i32) -> (i32, i32, i32) {
    %c0_i32 = arith.constant 0 : i32
    %c0_i32_0 = arith.constant 0 : i32
    %c0_i32_1 = arith.constant 0 : i32
    return %arg0, %c0_i32, %c0_i32_0 : i32, i32, i32
  }
}

</mosaic_0001>

<llo_original>
// kernel: tpu_custom_call.1
$region0: #{tpu_custom_call.1}
  #allocation0 [shape = 'u32[]', space=smem, size = 0x4, offset = 0x4, fixed_abs, tag = 'smem constant byte address 0x4 - core index']
  #allocation1 [shape = 'u32[144,128]{1,0:T(1,128)}', space=vmem, size = 0x12000, scoped, tag = 'internal scratch']
  #allocation2 [shape = 'f32[16,32]{1,0:T(8,128)}', space=vmem, size = 0x2000, scoped, tag = 'scratch operand']
  %s0 = inlined_call_operand.vmem [shape: f32[2,8,32], index: 0, kind: input, shape index: {}]
  %s1 = inlined_call_operand.vmem [shape: bf16[2,32,96], index: 1, kind: input, shape index: {}]
  %s2 = inlined_call_operand.vmem [shape: bf16[2,32,32], index: 2, kind: input, shape index: {}]
  %s3 = inlined_call_operand.vmem [shape: bf16[2,32,128], index: 3, kind: input, shape index: {}]
  %s4 = inlined_call_operand.vmem [shape: bf16[2,128,32], index: 4, kind: input, shape index: {}]
  %s5 = inlined_call_operand.vmem [shape: f32[2,6,32], index: 5, kind: input, shape index: {}]
  %s6 = inlined_call_operand.vmem [shape: f32[2,1,128], index: 6, kind: input, shape index: {}]
  %s7 = inlined_call_operand.hbm [shape: f32[2,8,32], index: 7, kind: output, shape index: {}]
  %s8 = sld [smem:[#allocation0]]
  $region69: #{tpu_custom_call.1} parent=0
    _
  %s10 = ssub.s32 1, %s8
  %s11 = scalar_select 0, %s10, %s8
  $region1: #{tpu_custom_call.1} parent=0
    #allocation3 [shape = 'u8[8192]{0}', space=vmem, size = 0x2000, scoped, tag = 'output window, operand 0, single buffered']
    #allocation4 [shape = 's32[2]{0}', space=sflag, size = 0x8, scoped, tag = 'scoped memory for tpu_custom_call.1']
    %12 = vsyncpa [#allocation4], 0
    loop: start=0, step=1, limit=4
    $region2: #{tpu_custom_call.1} parent=1 // loop_pre_header
      _
    $region3: #{tpu_custom_call.1} parent=1 // loop_header
      %s14 = sphi 0, %s18
      %p15 = scmp.ge.s32.totalorder %s14, 4
      %s21 = sphi 0, %s33
      %s22 = sphi 0, %s29
      %s23 = sphi 0, %s21
      %s24 = sphi 0, %s22
      %s25 = sphi 0, %s23
      %s26 = sphi 0, %s24
      %s36 = sphi 0, %s38
      %s39 = sphi 0, %s36
      %s40 = sphi 0, %s39
      %s56 = sphi 0, %s40
      %s62 = sphi 0, %s64
      %s65 = sphi 0, %s62
      %s66 = sphi 0, %s65
      %s82 = sphi 0, %s66
      %s88 = sphi 0, %s90
      %s91 = sphi 0, %s88
      %s92 = sphi 0, %s91
      %s108 = sphi 0, %s92
      %s114 = sphi 0, %s116
      %s117 = sphi 0, %s114
      %s118 = sphi 0, %s117
      %s134 = sphi 0, %s118
      %s140 = sphi 0, %s142
      %s143 = sphi 0, %s140
      %s144 = sphi 0, %s143
      %s160 = sphi 0, %s144
      %s166 = sphi 0, %s168
      %s169 = sphi 0, %s166
      %s170 = sphi 0, %s169
      %s186 = sphi 0, %s170
      %s192 = sphi 0, %s194
      %s195 = sphi 0, %s192
      %s196 = sphi 0, %s195
      %s212 = sphi 0, %s196
      %s218 = sphi 0, %s220
      %s221 = sphi 0, %s218
      %s222 = sphi 0, %s221
      %s238 = sphi 0, %s222
    $region4: #{tpu_custom_call.1} parent=1 // loop_header_branch
      %17 = sbr.rel (%p15) target = $region8
    $region5: #{tpu_custom_call.1} parent=1 // loop_body
      %s19 = ssub.s32 %s14, 1
      %s20 = ssub.s32 %s14, 2
      %s27 = sadd.s32 1, %s22
      %p28 = scmp.ge.s32.totalorder %s27, 2
      %s29 = scalar_select %p28, 0, %s27
      %s30 = sadd.s32 1, %s21
      %s31 = scalar_select %p28, %s30, %s21
      %p32 = scmp.ge.s32.totalorder %s31, 1
      %s33 = scalar_select %p32, 0, %s31
      %s34 = ssub.s32 %s21, %s33
      %p35 = scmp.eq.s32.totalorder %s34, 0
      %s37 = sadd.s32 %s36, 1
      %s38 = scalar_select %p35, %s36, %s37
      %p41 = pneg %p35
      %p42 = scmp.eq.s32.totalorder %s14, 1
      %p43 = por %p41, %p42
      %p44 = scmp.ne.s32.totalorder %s36, %s39
      %p45 = scmp.eq.s32.totalorder %s14, 0
      %p46 = por %p44, %p45
      %p47 = scmp.ne.s32.totalorder %s36, %s39
      %p48 = scmp.eq.s32.totalorder %s19, 1
      %p49 = por %p47, %p48
      %p50 = scmp.ne.s32.totalorder %s39, %s40
      %p51 = scmp.eq.s32.totalorder %s19, 0
      %p52 = por %p50, %p51
      %p53 = scmp.ne.s32.totalorder %s39, %s40
      %p54 = scmp.eq.s32.totalorder %s20, 1
      %p55 = por %p53, %p54
      %p57 = scmp.ne.s32.totalorder %s40, %s56
      %p58 = scmp.eq.s32.totalorder %s20, 0
      %p59 = por %p57, %p58
      %s60 = ssub.s32 %s22, %s29
      %p61 = scmp.eq.s32.totalorder %s60, 0
      %s63 = sadd.s32 %s62, 1
      %s64 = scalar_select %p61, %s62, %s63
      %p67 = pneg %p61
      %p68 = scmp.eq.s32.totalorder %s14, 1
      %p69 = por %p67, %p68
      %p70 = scmp.ne.s32.totalorder %s62, %s65
      %p71 = scmp.eq.s32.totalorder %s14, 0
      %p72 = por %p70, %p71
      %p73 = scmp.ne.s32.totalorder %s62, %s65
      %p74 = scmp.eq.s32.totalorder %s19, 1
      %p75 = por %p73, %p74
      %p76 = scmp.ne.s32.totalorder %s65, %s66
      %p77 = scmp.eq.s32.totalorder %s19, 0
      %p78 = por %p76, %p77
      %p79 = scmp.ne.s32.totalorder %s65, %s66
      %p80 = scmp.eq.s32.totalorder %s20, 1
      %p81 = por %p79, %p80
      %p83 = scmp.ne.s32.totalorder %s66, %s82
      %p84 = scmp.eq.s32.totalorder %s20, 0
      %p85 = por %p83, %p84
      %s86 = ssub.s32 %s22, %s29
      %p87 = scmp.eq.s32.totalorder %s86, 0
      %s89 = sadd.s32 %s88, 1
      %s90 = scalar_select %p87, %s88, %s89
      %p93 = pneg %p87
      %p94 = scmp.eq.s32.totalorder %s14, 1
      %p95 = por %p93, %p94
      %p96 = scmp.ne.s32.totalorder %s88, %s91
      %p97 = scmp.eq.s32.totalorder %s14, 0
      %p98 = por %p96, %p97
      %p99 = scmp.ne.s32.totalorder %s88, %s91
      %p100 = scmp.eq.s32.totalorder %s19, 1
      %p101 = por %p99, %p100
      %p102 = scmp.ne.s32.totalorder %s91, %s92
      %p103 = scmp.eq.s32.totalorder %s19, 0
      %p104 = por %p102, %p103
      %p105 = scmp.ne.s32.totalorder %s91, %s92
      %p106 = scmp.eq.s32.totalorder %s20, 1
      %p107 = por %p105, %p106
      %p109 = scmp.ne.s32.totalorder %s92, %s108
      %p110 = scmp.eq.s32.totalorder %s20, 0
      %p111 = por %p109, %p110
      %s112 = ssub.s32 %s22, %s29
      %p113 = scmp.eq.s32.totalorder %s112, 0
      %s115 = sadd.s32 %s114, 1
      %s116 = scalar_select %p113, %s114, %s115
      %p119 = pneg %p113
      %p120 = scmp.eq.s32.totalorder %s14, 1
      %p121 = por %p119, %p120
      %p122 = scmp.ne.s32.totalorder %s114, %s117
      %p123 = scmp.eq.s32.totalorder %s14, 0
      %p124 = por %p122, %p123
      %p125 = scmp.ne.s32.totalorder %s114, %s117
      %p126 = scmp.eq.s32.totalorder %s19, 1
      %p127 = por %p125, %p126
      %p128 = scmp.ne.s32.totalorder %s117, %s118
      %p129 = scmp.eq.s32.totalorder %s19, 0
      %p130 = por %p128, %p129
      %p131 = scmp.ne.s32.totalorder %s117, %s118
      %p132 = scmp.eq.s32.totalorder %s20, 1
      %p133 = por %p131, %p132
      %p135 = scmp.ne.s32.totalorder %s118, %s134
      %p136 = scmp.eq.s32.totalorder %s20, 0
      %p137 = por %p135, %p136
      %s138 = ssub.s32 %s22, %s29
      %p139 = scmp.eq.s32.totalorder %s138, 0
      %s141 = sadd.s32 %s140, 1
      %s142 = scalar_select %p139, %s140, %s141
      %p145 = pneg %p139
      %p146 = scmp.eq.s32.totalorder %s14, 1
      %p147 = por %p145, %p146
      %p148 = scmp.ne.s32.totalorder %s140, %s143
      %p149 = scmp.eq.s32.totalorder %s14, 0
      %p150 = por %p148, %p149
      %p151 = scmp.ne.s32.totalorder %s140, %s143
      %p152 = scmp.eq.s32.totalorder %s19, 1
      %p153 = por %p151, %p152
      %p154 = scmp.ne.s32.totalorder %s143, %s144
      %p155 = scmp.eq.s32.totalorder %s19, 0
      %p156 = por %p154, %p155
      %p157 = scmp.ne.s32.totalorder %s143, %s144
      %p158 = scmp.eq.s32.totalorder %s20, 1
      %p159 = por %p157, %p158
      %p161 = scmp.ne.s32.totalorder %s144, %s160
      %p162 = scmp.eq.s32.totalorder %s20, 0
      %p163 = por %p161, %p162
      %s164 = ssub.s32 %s22, %s29
      %p165 = scmp.eq.s32.totalorder %s164, 0
      %s167 = sadd.s32 %s166, 1
      %s168 = scalar_select %p165, %s166, %s167
      %p171 = pneg %p165
      %p172 = scmp.eq.s32.totalorder %s14, 1
      %p173 = por %p171, %p172
      %p174 = scmp.ne.s32.totalorder %s166, %s169
      %p175 = scmp.eq.s32.totalorder %s14, 0
      %p176 = por %p174, %p175
      %p177 = scmp.ne.s32.totalorder %s166, %s169
      %p178 = scmp.eq.s32.totalorder %s19, 1
      %p179 = por %p177, %p178
      %p180 = scmp.ne.s32.totalorder %s169, %s170
      %p181 = scmp.eq.s32.totalorder %s19, 0
      %p182 = por %p180, %p181
      %p183 = scmp.ne.s32.totalorder %s169, %s170
      %p184 = scmp.eq.s32.totalorder %s20, 1
      %p185 = por %p183, %p184
      %p187 = scmp.ne.s32.totalorder %s170, %s186
      %p188 = scmp.eq.s32.totalorder %s20, 0
      %p189 = por %p187, %p188
      %s190 = ssub.s32 %s22, %s29
      %p191 = scmp.eq.s32.totalorder %s190, 0
      %s193 = sadd.s32 %s192, 1
      %s194 = scalar_select %p191, %s192, %s193
      %p197 = pneg %p191
      %p198 = scmp.eq.s32.totalorder %s14, 1
      %p199 = por %p197, %p198
      %p200 = scmp.ne.s32.totalorder %s192, %s195
      %p201 = scmp.eq.s32.totalorder %s14, 0
      %p202 = por %p200, %p201
      %p203 = scmp.ne.s32.totalorder %s192, %s195
      %p204 = scmp.eq.s32.totalorder %s19, 1
      %p205 = por %p203, %p204
      %p206 = scmp.ne.s32.totalorder %s195, %s196
      %p207 = scmp.eq.s32.totalorder %s19, 0
      %p208 = por %p206, %p207
      %p209 = scmp.ne.s32.totalorder %s195, %s196
      %p210 = scmp.eq.s32.totalorder %s20, 1
      %p211 = por %p209, %p210
      %p213 = scmp.ne.s32.totalorder %s196, %s212
      %p214 = scmp.eq.s32.totalorder %s20, 0
      %p215 = por %p213, %p214
      %s216 = ssub.s32 %s21, %s33
      %p217 = scmp.eq.s32.totalorder %s216, 0
      %s219 = sadd.s32 %s218, 1
      %s220 = scalar_select %p217, %s218, %s219
      %p223 = pneg %p217
      %p224 = scmp.eq.s32.totalorder %s14, 1
      %p225 = por %p223, %p224
      %p226 = scmp.ne.s32.totalorder %s218, %s221
      %p227 = scmp.eq.s32.totalorder %s14, 0
      %p228 = por %p226, %p227
      %p229 = scmp.ne.s32.totalorder %s218, %s221
      %p230 = scmp.eq.s32.totalorder %s19, 1
      %p231 = por %p229, %p230
      %p232 = scmp.ne.s32.totalorder %s221, %s222
      %p233 = scmp.eq.s32.totalorder %s19, 0
      %p234 = por %p232, %p233
      %p235 = scmp.ne.s32.totalorder %s221, %s222
      %p236 = scmp.eq.s32.totalorder %s20, 1
      %p237 = por %p235, %p236
      %p239 = scmp.ne.s32.totalorder %s222, %s238
      %p240 = scmp.eq.s32.totalorder %s20, 0
      %p241 = por %p239, %p240
      %p242 = scmp.le.s32.totalorder 1, %s14
      %p243 = scmp.lt.s32.totalorder %s14, 3
      %p244 = pnand %p242, %p243
      %p245 = pneg %p244
      // Predicated region
      $region9: #{tpu_custom_call.1} parent=5 // pred_check
        _
      $region10: #{tpu_custom_call.1} parent=5 // pred_check_branch
        %247 = sbr.rel (%p244) target = $region12
      $region11: #{tpu_custom_call.1} parent=5 // pred_region
        %s248 = ssub.s32 %s14, 1
        // Predicated region
        $region13: #{tpu_custom_call.1} parent=11 // pred_check
          %p249 = pneg %p52
        $region14: #{tpu_custom_call.1} parent=11 // pred_check_branch
          %251 = sbr.rel (%p249) target = $region16
        $region15: #{tpu_custom_call.1} parent=11 // pred_region
          %s252 = smul.u32 2, %s23
          %p253 = scmp.lt.s32.totalorder %s252, 1
          %s254 = scalar_select %p253, %s252, 1
          %s255 = smul.addr %s254, 8
          %s256 = scalar_lea.vmem %s0, %s255
          %s257 = smul.u32 2, %s23
        $region16: #{tpu_custom_call.1} parent=11 // pred_fallthru
          _
      $region12: #{tpu_custom_call.1} parent=5 // pred_fallthru
        _
      %p258 = scmp.lt.s32.totalorder %s14, 2
      // Predicated region
      $region17: #{tpu_custom_call.1} parent=5 // pred_check
        %p259 = pneg %p258
      $region18: #{tpu_custom_call.1} parent=5 // pred_check_branch
        %261 = sbr.rel (%p259) target = $region20
      $region19: #{tpu_custom_call.1} parent=5 // pred_region
        // Predicated region
        $region21: #{tpu_custom_call.1} parent=19 // pred_check
          %p262 = pneg %p72
        $region22: #{tpu_custom_call.1} parent=19 // pred_check_branch
          %264 = sbr.rel (%p262) target = $region24
        $region23: #{tpu_custom_call.1} parent=19 // pred_region
          %p265 = scmp.lt.s32.totalorder %s22, 1
          %s266 = scalar_select %p265, %s22, 1
          %s267 = smul.addr %s266, 4
          %s268 = smul.addr %s267, 4
          %s269 = scalar_lea.vmem %s1, %s268
        $region24: #{tpu_custom_call.1} parent=19 // pred_fallthru
          _
        // Predicated region
        $region25: #{tpu_custom_call.1} parent=19 // pred_check
          %p270 = pneg %p98
        $region26: #{tpu_custom_call.1} parent=19 // pred_check_branch
          %272 = sbr.rel (%p270) target = $region28
        $region27: #{tpu_custom_call.1} parent=19 // pred_region
          %p273 = scmp.lt.s32.totalorder %s22, 1
          %s274 = scalar_select %p273, %s22, 1
          %s275 = smul.addr %s274, 4
          %s276 = smul.addr %s275, 4
          %s277 = scalar_lea.vmem %s2, %s276
        $region28: #{tpu_custom_call.1} parent=19 // pred_fallthru
          _
        // Predicated region
        $region29: #{tpu_custom_call.1} parent=19 // pred_check
          %p278 = pneg %p124
        $region30: #{tpu_custom_call.1} parent=19 // pred_check_branch
          %280 = sbr.rel (%p278) target = $region32
        $region31: #{tpu_custom_call.1} parent=19 // pred_region
          %p281 = scmp.lt.s32.totalorder %s22, 1
          %s282 = scalar_select %p281, %s22, 1
          %s283 = smul.addr %s282, 4
          %s284 = smul.addr %s283, 4
          %s285 = scalar_lea.vmem %s3, %s284
        $region32: #{tpu_custom_call.1} parent=19 // pred_fallthru
          _
        // Predicated region
        $region33: #{tpu_custom_call.1} parent=19 // pred_check
          %p286 = pneg %p150
        $region34: #{tpu_custom_call.1} parent=19 // pred_check_branch
          %288 = sbr.rel (%p286) target = $region36
        $region35: #{tpu_custom_call.1} parent=19 // pred_region
          %p289 = scmp.lt.s32.totalorder %s22, 1
          %s290 = scalar_select %p289, %s22, 1
          %s291 = smul.addr %s290, 16
          %s292 = smul.addr %s291, 4
          %s293 = scalar_lea.vmem %s4, %s292
        $region36: #{tpu_custom_call.1} parent=19 // pred_fallthru
          _
        // Predicated region
        $region37: #{tpu_custom_call.1} parent=19 // pred_check
          %p294 = pneg %p176
        $region38: #{tpu_custom_call.1} parent=19 // pred_check_branch
          %296 = sbr.rel (%p294) target = $region40
        $region39: #{tpu_custom_call.1} parent=19 // pred_region
          %p297 = scmp.lt.s32.totalorder %s22, 1
          %s298 = scalar_select %p297, %s22, 1
          %s299 = smul.addr %s298, 8
          %s300 = scalar_lea.vmem %s5, %s299
        $region40: #{tpu_custom_call.1} parent=19 // pred_fallthru
          _
        // Predicated region
        $region41: #{tpu_custom_call.1} parent=19 // pred_check
          %p301 = pneg %p202
        $region42: #{tpu_custom_call.1} parent=19 // pred_check_branch
          %303 = sbr.rel (%p301) target = $region44
        $region43: #{tpu_custom_call.1} parent=19 // pred_region
          %p304 = scmp.lt.s32.totalorder %s22, 1
          %s305 = scalar_select %p304, %s22, 1
          %s306 = scalar_lea.vmem %s6, %s305
        $region44: #{tpu_custom_call.1} parent=19 // pred_fallthru
          _
      $region20: #{tpu_custom_call.1} parent=5 // pred_fallthru
        _
      %p307 = scmp.le.s32.totalorder 1, %s14
      %p308 = scmp.lt.s32.totalorder %s14, 3
      %p309 = pnand %p307, %p308
      %p310 = pneg %p309
      // Predicated region
      $region45: #{tpu_custom_call.1} parent=5 // pred_check
        _
      $region46: #{tpu_custom_call.1} parent=5 // pred_check_branch
        %312 = sbr.rel (%p309) target = $region48
      $region47: #{tpu_custom_call.1} parent=5 // pred_region
        %s313 = ssub.s32 %s14, 1
        %s314 = smul.u32 2, %s23
        %p315 = scmp.lt.s32.totalorder %s314, 1
        %s316 = scalar_select %p315, %s314, 1
        %s317 = smul.addr %s316, 8
        %s318 = scalar_lea.vmem %s0, %s317
        %p319 = pneg %p52
        %p320 = pneg %p49
        %p321 = scmp.lt.s32.totalorder %s24, 1
        %s322 = scalar_select %p321, %s24, 1
        %s323 = smul.addr %s322, 4
        %s324 = smul.addr %s323, 4
        %s325 = scalar_lea.vmem %s1, %s324
        %p326 = pneg %p78
        %p327 = pneg %p75
        %p328 = scmp.lt.s32.totalorder %s24, 1
        %s329 = scalar_select %p328, %s24, 1
        %s330 = smul.addr %s329, 4
        %s331 = smul.addr %s330, 4
        %s332 = scalar_lea.vmem %s2, %s331
        %p333 = pneg %p104
        %p334 = pneg %p101
        %p335 = scmp.lt.s32.totalorder %s24, 1
        %s336 = scalar_select %p335, %s24, 1
        %s337 = smul.addr %s336, 4
        %s338 = smul.addr %s337, 4
        %s339 = scalar_lea.vmem %s3, %s338
        %p340 = pneg %p130
        %p341 = pneg %p127
        %p342 = scmp.lt.s32.totalorder %s24, 1
        %s343 = scalar_select %p342, %s24, 1
        %s344 = smul.addr %s343, 16
        %s345 = smul.addr %s344, 4
        %s346 = scalar_lea.vmem %s4, %s345
        %p347 = pneg %p156
        %p348 = pneg %p153
        %p349 = scmp.lt.s32.totalorder %s24, 1
        %s350 = scalar_select %p349, %s24, 1
        %s351 = smul.addr %s350, 8
        %s352 = scalar_lea.vmem %s5, %s351
        %p353 = pneg %p182
        %p354 = pneg %p179
        %p355 = scmp.lt.s32.totalorder %s24, 1
        %s356 = scalar_select %p355, %s24, 1
        %s357 = scalar_lea.vmem %s6, %s356
        %p358 = pneg %p208
        %p359 = pneg %p205
        %p360 = pneg %p234
        %p361 = pneg %p231
        %s362 = smul.u32 2, %s23
        %p363 = scmp.lt.s32.totalorder %s362, 1
        %s364 = scalar_select %p363, %s362, 1
        %s365 = smul.addr %s364, 8
        %s366 = scalar_lea.vmem %s0, %s365
        %s367 = smul.u32 2, %s23
        %p368 = scmp.lt.s32.totalorder %s24, 1
        %s369 = scalar_select %p368, %s24, 1
        %s370 = smul.addr %s369, 4
        %s371 = smul.addr %s370, 4
        %s372 = scalar_lea.vmem %s1, %s371
        %p373 = scmp.lt.s32.totalorder %s24, 1
        %s374 = scalar_select %p373, %s24, 1
        %s375 = smul.addr %s374, 4
        %s376 = smul.addr %s375, 4
        %s377 = scalar_lea.vmem %s2, %s376
        %p378 = scmp.lt.s32.totalorder %s24, 1
        %s379 = scalar_select %p378, %s24, 1
        %s380 = smul.addr %s379, 4
        %s381 = smul.addr %s380, 4
        %s382 = scalar_lea.vmem %s3, %s381
        %p383 = scmp.lt.s32.totalorder %s24, 1
        %s384 = scalar_select %p383, %s24, 1
        %s385 = smul.addr %s384, 16
        %s386 = smul.addr %s385, 4
        %s387 = scalar_lea.vmem %s4, %s386
        %p388 = scmp.lt.s32.totalorder %s24, 1
        %s389 = scalar_select %p388, %s24, 1
        %s390 = smul.addr %s389, 8
        %s391 = scalar_lea.vmem %s5, %s390
        %p392 = scmp.lt.s32.totalorder %s24, 1
        %s393 = scalar_select %p392, %s24, 1
        %s394 = scalar_lea.vmem %s6, %s393
        %s395 = smul.u32 2, %s23
        %p397 = scmp.eq.s32.totalorder %s24, 0
        // Predicated region
        $region49: #{tpu_custom_call.1} parent=47 // pred_check
          %p398 = pneg %p397
        $region50: #{tpu_custom_call.1} parent=47 // pred_check_branch
          %400 = sbr.rel (%p398) target = $region52
        $region51: #{tpu_custom_call.1} parent=47 // pred_region
          %v401 = vld [vmem:[%s366] sm:$0xff]
          %v402 = vld [vmem:[%s366 + $0x8] sm:$0xff]
          %vm403 = vcmask 261120
          %404 = vst.msk [vmem:[#allocation2] sm:$0xff] %vm403, %v401
          %405 = vst.msk [vmem:[#allocation2 + $0x8] sm:$0xff] %vm403, %v402
        $region52: #{tpu_custom_call.1} parent=47 // pred_fallthru
          _
        %v406 = vld [vmem:[#allocation2] sm:$0xff]
        %v407 = vld [vmem:[#allocation2 + $0x8] sm:$0xff]
        %v408 = vld [vmem:[%s391] sm:$0x3f]
        %vm409 = vcmask 261120
        %v410 = vsel %vm409, %v406, 0.0
        %411 = vadd.xlane.f32.xlu0 %v410
        %v412 = vpop.xlane.xlu0 %411
        %v413 = vsel %vm409, %v407, 0.0
        %414 = vadd.xlane.f32.xlu0 %v413
        %v415 = vpop.xlane.xlu0 %414
        %v416 = vrcp.pop 32.0
        %v417 = vmul.f32 %v412, %v416
        %v418 = vmul.f32 %v415, %v416
        %v419 = vsub.f32 %v406, %v417
        %v420 = vsub.f32 %v407, %v418
        %v421 = vmul.f32 %v419, %v419
        %v422 = vmul.f32 %v420, %v420
        %v423 = vsel %vm409, %v421, 0.0
        %424 = vadd.xlane.f32.xlu0 %v423
        %v425 = vpop.xlane.xlu0 %424
        %v426 = vsel %vm409, %v422, 0.0
        %427 = vadd.xlane.f32.xlu0 %v426
        %v428 = vpop.xlane.xlu0 %427
        %v429 = vmul.f32 %v425, %v416
        %v430 = vmul.f32 %v428, %v416
        %v431 = vadd.f32 %v429, 1e-05
        %v432 = vadd.f32 %v430, 1e-05
        %v433 = vrsqrt.pop %v431
        %v434 = vrsqrt.pop %v432
        %v435 = vmul.f32 %v419, %v433
        %v436 = vmul.f32 %v420, %v434
        %v437 = vlaneseq
        %v438 = vshrl.u32 %v437, 7
        %v439 = vsub.s32 0, %v438
        %v440 = vrot.slane %v408, %v439
        %v441 = vmul.f32 %v435, %v440
        %v442 = vmul.f32 %v436, %v440
        %v443 = vlaneseq
        %v444 = vshrl.u32 %v443, 7
        %v445 = vsub.s32 1, %v444
        %v446 = vrot.slane %v408, %v445
        %v447 = vadd.f32 %v441, %v446
        %v448 = vadd.f32 %v442, %v446
        %v449 = vpack.c.bf16 %v448, %v447
        %v450 = vld [vmem:[%s372] sm:$0xf]
        %v451 = vld [vmem:[%s372 + $0x4] sm:$0xf]
        %v452 = vld [vmem:[%s372 + $0x8] sm:$0xf]
        %v453 = vld [vmem:[%s372 + $0xc] sm:$0xf]
        %v458 = vunpack.c.l.b16 %v450
        %v459 = vunpack.c.l.b16 %v451
        %v460 = vunpack.c.l.b16 %v452
        %v461 = vunpack.c.l.b16 %v453
        %v462 = vpack.c.b16 %v459, %v458
        %v463 = vpack.c.b16 %v461, %v460
        %v467 = vsel %vm409, %v449, 0
        %469 = vmatprep.subr.bf16.mxu0 0
        %470 = vmatpush1.bf16.msra.mxu0 0
        %471 = vmatprep.subr.bf16.mxu0 0
        %472 = vmatpush1.bf16.msra.mxu0 0
        %473 = vmatprep.subr.bf16.mxu0 0
        %474 = vmatpush1.bf16.msra.mxu0 0
        %475 = vmatprep.subr.bf16.mxu0 0
        %476 = vmatpush1.bf16.msra.mxu0 0
        %477 = vmatprep.subr.bf16.mxu0 0
        %478 = vmatpush1.bf16.msra.mxu0 0
        %479 = vmatprep.subr.bf16.mxu0 0
        %480 = vmatpush1.bf16.msra.mxu0 0
        %481 = vmatprep.subr.bf16.mxu0 0
        %482 = vmatpush1.bf16.msra.mxu0 %v463
        %483 = vmatprep.subr.bf16.mxu0 0
        %484 = vmatpush1.bf16.msra.mxu0 %v462
        %485 = vmatprep.subr.bf16.mxu0 0
        %486 = vmatpush2.bf16.msra.mxu0 0
        %487 = vmatprep.subr.bf16.mxu0 0
        %488 = vmatpush2.bf16.msra.mxu0 0
        %489 = vmatprep.subr.bf16.mxu0 0
        %490 = vmatpush2.bf16.msra.mxu0 0
        %491 = vmatprep.subr.bf16.mxu0 0
        %492 = vmatpush2.bf16.msra.mxu0 0
        %493 = vmatprep.subr.bf16.mxu0 0
        %494 = vmatpush2.bf16.msra.mxu0 0
        %495 = vmatprep.subr.bf16.mxu0 0
        %496 = vmatpush2.bf16.msra.mxu0 0
        %497 = vmatprep.subr.bf16.mxu0 0
        %498 = vmatpush2.bf16.msra.mxu0 0
        %499 = vmatprep.subr.bf16.mxu0 0
        %500 = vmatpush2.bf16.msra.mxu0 0
        %501 = vmatprep.mubr.bf16.mxu0 0
        %502 = vmatmul.mubr.bf16.gmra.mxu0 %v467
        %v503 = vpop.f32.mrf.mxu0
        %v504 = vadd.f32 0.0, %v503
        %v505 = vpop.f32.mrf.mxu0
        %v506 = vpop.f32.mrf.mxu0
        %v507 = vadd.f32 0.0, %v506
        %v508 = vpop.f32.mrf.mxu0
        %509 = vdwg.mxu0
        %v510 = vlaneseq
        %v511 = vshrl.u32 %v510, 7
        %v512 = vlaneseq
        %v513 = vand.u32 %v512, 127
        %vm514 = vcmp.le.s32.totalorder %v513, %v511
        %v515 = vsel %vm514, 0.0, -1e+30
        %517 = vrot.lane.b32.xlu0 %v504, 120
        %v518 = vpop.permute.xlu0 %517
        %520 = vrot.lane.b32.xlu0 %v504, 112
        %v521 = vpop.permute.xlu0 %520
        %523 = vrot.lane.b32.xlu0 %v504, 104
        %v524 = vpop.permute.xlu0 %523
        %v526 = vcombine.low %v504, %v521
        %v527 = vcombine.high %v504, %v521
        %v529 = vunpack.c.l.s4 1983009808
        %v530 = vunpack.c.0.s8 %v529
        %v531 = vlaneseq
        %v532 = vshrl.u32 %v531, 7
        %v533 = vsub.s32 %v530, %v532
        %v534 = vrot.slane %v526, %v533
        %v536 = vunpack.c.l.s4 1983009808
        %v537 = vunpack.c.0.s8 %v536
        %v538 = vlaneseq
        %v539 = vshrl.u32 %v538, 7
        %v540 = vsub.s32 %v537, %v539
        %v541 = vrot.slane %v527, %v540
        %v542 = vcombine.low %v518, %v524
        %v543 = vcombine.high %v518, %v524
        %v545 = vunpack.c.l.s4 1983009808
        %v546 = vunpack.c.0.s8 %v545
        %v547 = vlaneseq
        %v548 = vshrl.u32 %v547, 7
        %v549 = vsub.s32 %v546, %v548
        %v550 = vrot.slane %v542, %v549
        %v552 = vunpack.c.l.s4 1983009808
        %v553 = vunpack.c.0.s8 %v552
        %v554 = vlaneseq
        %v555 = vshrl.u32 %v554, 7
        %v556 = vsub.s32 %v553, %v555
        %v557 = vrot.slane %v543, %v556
        %v558 = vcombine.low %v534, %v550
        %v559 = vcombine.high %v534, %v550
        %v561 = vunpack.c.l.s4 1934713408
        %v562 = vunpack.c.0.s8 %v561
        %v563 = vlaneseq
        %v564 = vshrl.u32 %v563, 7
        %v565 = vsub.s32 %v562, %v564
        %v566 = vrot.slane %v558, %v565
        %v568 = vunpack.c.l.s4 1934713408
        %v569 = vunpack.c.0.s8 %v568
        %v570 = vlaneseq
        %v571 = vshrl.u32 %v570, 7
        %v572 = vsub.s32 %v569, %v571
        %v573 = vrot.slane %v559, %v572
        %v574 = vcombine.low %v541, %v557
        %v575 = vcombine.high %v541, %v557
        %v577 = vunpack.c.l.s4 1934713408
        %v578 = vunpack.c.0.s8 %v577
        %v579 = vlaneseq
        %v580 = vshrl.u32 %v579, 7
        %v581 = vsub.s32 %v578, %v580
        %v582 = vrot.slane %v574, %v581
        %v584 = vunpack.c.l.s4 1934713408
        %v585 = vunpack.c.0.s8 %v584
        %v586 = vlaneseq
        %v587 = vshrl.u32 %v586, 7
        %v588 = vsub.s32 %v585, %v587
        %v589 = vrot.slane %v575, %v588
        %v590 = vcombine.high %v566, 0.0
        %v591 = vcombine.high %v573, 0.0
        %v592 = vcombine.high %v582, 0.0
        %v593 = vcombine.high %v589, 0.0
        %594 = vrot.lane.b32.xlu0 %v504, 96
        %v595 = vpop.permute.xlu0 %594
        %596 = vrot.lane.b32.xlu0 %v518, 96
        %v597 = vpop.permute.xlu0 %596
        %598 = vrot.lane.b32.xlu0 %v521, 96
        %v599 = vpop.permute.xlu0 %598
        %600 = vrot.lane.b32.xlu0 %v524, 96
        %v601 = vpop.permute.xlu0 %600
        %v606 = vcombine.low %v595, %v599
        %v607 = vcombine.high %v595, %v599
        %v609 = vunpack.c.l.s4 1983009808
        %v610 = vunpack.c.0.s8 %v609
        %v611 = vlaneseq
        %v612 = vshrl.u32 %v611, 7
        %v613 = vsub.s32 %v610, %v612
        %v614 = vrot.slane %v606, %v613
        %v616 = vunpack.c.l.s4 1983009808
        %v617 = vunpack.c.0.s8 %v616
        %v618 = vlaneseq
        %v619 = vshrl.u32 %v618, 7
        %v620 = vsub.s32 %v617, %v619
        %v621 = vrot.slane %v607, %v620
        %v622 = vcombine.low %v597, %v601
        %v623 = vcombine.high %v597, %v601
        %v625 = vunpack.c.l.s4 1983009808
        %v626 = vunpack.c.0.s8 %v625
        %v627 = vlaneseq
        %v628 = vshrl.u32 %v627, 7
        %v629 = vsub.s32 %v626, %v628
        %v630 = vrot.slane %v622, %v629
        %v632 = vunpack.c.l.s4 1983009808
        %v633 = vunpack.c.0.s8 %v632
        %v634 = vlaneseq
        %v635 = vshrl.u32 %v634, 7
        %v636 = vsub.s32 %v633, %v635
        %v637 = vrot.slane %v623, %v636
        %v638 = vcombine.low %v614, %v630
        %v639 = vcombine.high %v614, %v630
        %v641 = vunpack.c.l.s4 1934713408
        %v642 = vunpack.c.0.s8 %v641
        %v643 = vlaneseq
        %v644 = vshrl.u32 %v643, 7
        %v645 = vsub.s32 %v642, %v644
        %v646 = vrot.slane %v638, %v645
        %v648 = vunpack.c.l.s4 1934713408
        %v649 = vunpack.c.0.s8 %v648
        %v650 = vlaneseq
        %v651 = vshrl.u32 %v650, 7
        %v652 = vsub.s32 %v649, %v651
        %v653 = vrot.slane %v639, %v652
        %v654 = vcombine.low %v621, %v637
        %v655 = vcombine.high %v621, %v637
        %v657 = vunpack.c.l.s4 1934713408
        %v658 = vunpack.c.0.s8 %v657
        %v659 = vlaneseq
        %v660 = vshrl.u32 %v659, 7
        %v661 = vsub.s32 %v658, %v660
        %v662 = vrot.slane %v654, %v661
        %v664 = vunpack.c.l.s4 1934713408
        %v665 = vunpack.c.0.s8 %v664
        %v666 = vlaneseq
        %v667 = vshrl.u32 %v666, 7
        %v668 = vsub.s32 %v665, %v667
        %v669 = vrot.slane %v655, %v668
        %v670 = vcombine.high %v646, 0.0
        %v671 = vcombine.high %v653, 0.0
        %v672 = vcombine.high %v662, 0.0
        %v673 = vcombine.high %v669, 0.0
        %674 = vrot.lane.b32.xlu0 %v504, 64
        %v675 = vpop.permute.xlu0 %674
        %676 = vrot.lane.b32.xlu0 %v518, 64
        %v677 = vpop.permute.xlu0 %676
        %678 = vrot.lane.b32.xlu0 %v521, 64
        %v679 = vpop.permute.xlu0 %678
        %680 = vrot.lane.b32.xlu0 %v524, 64
        %v681 = vpop.permute.xlu0 %680
        %v686 = vcombine.low %v675, %v679
        %v687 = vcombine.high %v675, %v679
        %v689 = vunpack.c.l.s4 1983009808
        %v690 = vunpack.c.0.s8 %v689
        %v691 = vlaneseq
        %v692 = vshrl.u32 %v691, 7
        %v693 = vsub.s32 %v690, %v692
        %v694 = vrot.slane %v686, %v693
        %v696 = vunpack.c.l.s4 1983009808
        %v697 = vunpack.c.0.s8 %v696
        %v698 = vlaneseq
        %v699 = vshrl.u32 %v698, 7
        %v700 = vsub.s32 %v697, %v699
        %v701 = vrot.slane %v687, %v700
        %v702 = vcombine.low %v677, %v681
        %v703 = vcombine.high %v677, %v681
        %v705 = vunpack.c.l.s4 1983009808
        %v706 = vunpack.c.0.s8 %v705
        %v707 = vlaneseq
        %v708 = vshrl.u32 %v707, 7
        %v709 = vsub.s32 %v706, %v708
        %v710 = vrot.slane %v702, %v709
        %v712 = vunpack.c.l.s4 1983009808
        %v713 = vunpack.c.0.s8 %v712
        %v714 = vlaneseq
        %v715 = vshrl.u32 %v714, 7
        %v716 = vsub.s32 %v713, %v715
        %v717 = vrot.slane %v703, %v716
        %v718 = vcombine.low %v694, %v710
        %v719 = vcombine.high %v694, %v710
        %v721 = vunpack.c.l.s4 1934713408
        %v722 = vunpack.c.0.s8 %v721
        %v723 = vlaneseq
        %v724 = vshrl.u32 %v723, 7
        %v725 = vsub.s32 %v722, %v724
        %v726 = vrot.slane %v718, %v725
        %v728 = vunpack.c.l.s4 1934713408
        %v729 = vunpack.c.0.s8 %v728
        %v730 = vlaneseq
        %v731 = vshrl.u32 %v730, 7
        %v732 = vsub.s32 %v729, %v731
        %v733 = vrot.slane %v719, %v732
        %v734 = vcombine.low %v701, %v717
        %v735 = vcombine.high %v701, %v717
        %v737 = vunpack.c.l.s4 1934713408
        %v738 = vunpack.c.0.s8 %v737
        %v739 = vlaneseq
        %v740 = vshrl.u32 %v739, 7
        %v741 = vsub.s32 %v738, %v740
        %v742 = vrot.slane %v734, %v741
        %v744 = vunpack.c.l.s4 1934713408
        %v745 = vunpack.c.0.s8 %v744
        %v746 = vlaneseq
        %v747 = vshrl.u32 %v746, 7
        %v748 = vsub.s32 %v745, %v747
        %v749 = vrot.slane %v735, %v748
        %v750 = vcombine.high %v726, 0.0
        %v751 = vcombine.high %v733, 0.0
        %v752 = vcombine.high %v742, 0.0
        %v753 = vcombine.high %v749, 0.0
        %v754 = vcombine.low %v566, %v573
        %v756 = vunpack.c.l.s4 1983009808
        %v757 = vunpack.c.0.s8 %v756
        %v758 = vlaneseq
        %v759 = vshrl.u32 %v758, 7
        %v760 = vsub.s32 %v757, %v759
        %v761 = vrot.slane %v754, %v760
        %v762 = vcombine.low %v590, %v591
        %v764 = vunpack.c.l.s4 1983009808
        %v765 = vunpack.c.0.s8 %v764
        %v766 = vlaneseq
        %v767 = vshrl.u32 %v766, 7
        %v768 = vsub.s32 %v765, %v767
        %v769 = vrot.slane %v762, %v768
        %v770 = vcombine.low %v582, %v589
        %v772 = vunpack.c.l.s4 1983009808
        %v773 = vunpack.c.0.s8 %v772
        %v774 = vlaneseq
        %v775 = vshrl.u32 %v774, 7
        %v776 = vsub.s32 %v773, %v775
        %v777 = vrot.slane %v770, %v776
        %v778 = vcombine.low %v592, %v593
        %v780 = vunpack.c.l.s4 1983009808
        %v781 = vunpack.c.0.s8 %v780
        %v782 = vlaneseq
        %v783 = vshrl.u32 %v782, 7
        %v784 = vsub.s32 %v781, %v783
        %v785 = vrot.slane %v778, %v784
        %v786 = vcombine.low %v761, %v769
        %v787 = vcombine.high %v761, %v769
        %v789 = vunpack.c.l.s4 1934713408
        %v790 = vunpack.c.0.s8 %v789
        %v791 = vlaneseq
        %v792 = vshrl.u32 %v791, 7
        %v793 = vsub.s32 %v790, %v792
        %v794 = vrot.slane %v786, %v793
        %v796 = vunpack.c.l.s4 1934713408
        %v797 = vunpack.c.0.s8 %v796
        %v798 = vlaneseq
        %v799 = vshrl.u32 %v798, 7
        %v800 = vsub.s32 %v797, %v799
        %v801 = vrot.slane %v787, %v800
        %v802 = vcombine.low %v777, %v785
        %v803 = vcombine.high %v777, %v785
        %v805 = vunpack.c.l.s4 1934713408
        %v806 = vunpack.c.0.s8 %v805
        %v807 = vlaneseq
        %v808 = vshrl.u32 %v807, 7
        %v809 = vsub.s32 %v806, %v808
        %v810 = vrot.slane %v802, %v809
        %v812 = vunpack.c.l.s4 1934713408
        %v813 = vunpack.c.0.s8 %v812
        %v814 = vlaneseq
        %v815 = vshrl.u32 %v814, 7
        %v816 = vsub.s32 %v813, %v815
        %v817 = vrot.slane %v803, %v816
        %v818 = vcombine.low %v794, %v810
        %v819 = vcombine.high %v794, %v810
        %v820 = vcombine.low %v801, %v817
        %v821 = vcombine.high %v801, %v817
        %v822 = vpack.c.bf16 %v818, %v818
        %v823 = vpack.c.bf16 %v819, %v819
        %v824 = vpack.c.bf16 %v820, %v820
        %v825 = vpack.c.bf16 %v821, %v821
        %v826 = vcombine.low %v646, %v653
        %v828 = vunpack.c.l.s4 1983009808
        %v829 = vunpack.c.0.s8 %v828
        %v830 = vlaneseq
        %v831 = vshrl.u32 %v830, 7
        %v832 = vsub.s32 %v829, %v831
        %v833 = vrot.slane %v826, %v832
        %v834 = vcombine.low %v670, %v671
        %v836 = vunpack.c.l.s4 1983009808
        %v837 = vunpack.c.0.s8 %v836
        %v838 = vlaneseq
        %v839 = vshrl.u32 %v838, 7
        %v840 = vsub.s32 %v837, %v839
        %v841 = vrot.slane %v834, %v840
        %v842 = vcombine.low %v662, %v669
        %v844 = vunpack.c.l.s4 1983009808
        %v845 = vunpack.c.0.s8 %v844
        %v846 = vlaneseq
        %v847 = vshrl.u32 %v846, 7
        %v848 = vsub.s32 %v845, %v847
        %v849 = vrot.slane %v842, %v848
        %v850 = vcombine.low %v672, %v673
        %v852 = vunpack.c.l.s4 1983009808
        %v853 = vunpack.c.0.s8 %v852
        %v854 = vlaneseq
        %v855 = vshrl.u32 %v854, 7
        %v856 = vsub.s32 %v853, %v855
        %v857 = vrot.slane %v850, %v856
        %v858 = vcombine.low %v833, %v841
        %v859 = vcombine.high %v833, %v841
        %v861 = vunpack.c.l.s4 1934713408
        %v862 = vunpack.c.0.s8 %v861
        %v863 = vlaneseq
        %v864 = vshrl.u32 %v863, 7
        %v865 = vsub.s32 %v862, %v864
        %v866 = vrot.slane %v858, %v865
        %v868 = vunpack.c.l.s4 1934713408
        %v869 = vunpack.c.0.s8 %v868
        %v870 = vlaneseq
        %v871 = vshrl.u32 %v870, 7
        %v872 = vsub.s32 %v869, %v871
        %v873 = vrot.slane %v859, %v872
        %v874 = vcombine.low %v849, %v857
        %v875 = vcombine.high %v849, %v857
        %v877 = vunpack.c.l.s4 1934713408
        %v878 = vunpack.c.0.s8 %v877
        %v879 = vlaneseq
        %v880 = vshrl.u32 %v879, 7
        %v881 = vsub.s32 %v878, %v880
        %v882 = vrot.slane %v874, %v881
        %v884 = vunpack.c.l.s4 1934713408
        %v885 = vunpack.c.0.s8 %v884
        %v886 = vlaneseq
        %v887 = vshrl.u32 %v886, 7
        %v888 = vsub.s32 %v885, %v887
        %v889 = vrot.slane %v875, %v888
        %v890 = vcombine.low %v866, %v882
        %v891 = vcombine.high %v866, %v882
        %v892 = vcombine.low %v873, %v889
        %v893 = vcombine.high %v873, %v889
        %v894 = vpack.c.bf16 %v890, %v890
        %v895 = vpack.c.bf16 %v891, %v891
        %v896 = vpack.c.bf16 %v892, %v892
        %v897 = vpack.c.bf16 %v893, %v893
        %v898 = vcombine.low %v726, %v733
        %v900 = vunpack.c.l.s4 1983009808
        %v901 = vunpack.c.0.s8 %v900
        %v902 = vlaneseq
        %v903 = vshrl.u32 %v902, 7
        %v904 = vsub.s32 %v901, %v903
        %v905 = vrot.slane %v898, %v904
        %v906 = vcombine.low %v750, %v751
        %v908 = vunpack.c.l.s4 1983009808
        %v909 = vunpack.c.0.s8 %v908
        %v910 = vlaneseq
        %v911 = vshrl.u32 %v910, 7
        %v912 = vsub.s32 %v909, %v911
        %v913 = vrot.slane %v906, %v912
        %v914 = vcombine.low %v742, %v749
        %v916 = vunpack.c.l.s4 1983009808
        %v917 = vunpack.c.0.s8 %v916
        %v918 = vlaneseq
        %v919 = vshrl.u32 %v918, 7
        %v920 = vsub.s32 %v917, %v919
        %v921 = vrot.slane %v914, %v920
        %v922 = vcombine.low %v752, %v753
        %v924 = vunpack.c.l.s4 1983009808
        %v925 = vunpack.c.0.s8 %v924
        %v926 = vlaneseq
        %v927 = vshrl.u32 %v926, 7
        %v928 = vsub.s32 %v925, %v927
        %v929 = vrot.slane %v922, %v928
        %v930 = vcombine.low %v905, %v913
        %v931 = vcombine.high %v905, %v913
        %v933 = vunpack.c.l.s4 1934713408
        %v934 = vunpack.c.0.s8 %v933
        %v935 = vlaneseq
        %v936 = vshrl.u32 %v935, 7
        %v937 = vsub.s32 %v934, %v936
        %v938 = vrot.slane %v930, %v937
        %v940 = vunpack.c.l.s4 1934713408
        %v941 = vunpack.c.0.s8 %v940
        %v942 = vlaneseq
        %v943 = vshrl.u32 %v942, 7
        %v944 = vsub.s32 %v941, %v943
        %v945 = vrot.slane %v931, %v944
        %v946 = vcombine.low %v921, %v929
        %v947 = vcombine.high %v921, %v929
        %v949 = vunpack.c.l.s4 1934713408
        %v950 = vunpack.c.0.s8 %v949
        %v951 = vlaneseq
        %v952 = vshrl.u32 %v951, 7
        %v953 = vsub.s32 %v950, %v952
        %v954 = vrot.slane %v946, %v953
        %v956 = vunpack.c.l.s4 1934713408
        %v957 = vunpack.c.0.s8 %v956
        %v958 = vlaneseq
        %v959 = vshrl.u32 %v958, 7
        %v960 = vsub.s32 %v957, %v959
        %v961 = vrot.slane %v947, %v960
        %v962 = vcombine.low %v938, %v954
        %v963 = vcombine.high %v938, %v954
        %v964 = vcombine.low %v945, %v961
        %v965 = vcombine.high %v945, %v961
        %v966 = vpack.c.bf16 %v962, %v962
        %v967 = vpack.c.bf16 %v963, %v963
        %v968 = vpack.c.bf16 %v964, %v964
        %v969 = vpack.c.bf16 %v965, %v965
        %vm970 = vcmask 64512
        %v972 = vsel %vm970, %v822, 0
        %v975 = vsel %vm970, %v894, 0
        %977 = vmatprep.subr.bf16.mxu0 0
        %978 = vmatpush1.bf16.xpose.msra.mxu0 0
        %979 = vmatprep.subr.bf16.mxu0 0
        %980 = vmatpush1.bf16.xpose.msra.mxu0 0
        %981 = vmatprep.subr.bf16.mxu0 0
        %982 = vmatpush1.bf16.xpose.msra.mxu0 0
        %983 = vmatprep.subr.bf16.mxu0 0
        %984 = vmatpush1.bf16.xpose.msra.mxu0 0
        %985 = vmatprep.subr.bf16.mxu0 0
        %986 = vmatpush1.bf16.xpose.msra.mxu0 0
        %987 = vmatprep.subr.bf16.mxu0 0
        %988 = vmatpush1.bf16.xpose.msra.mxu0 0
        %989 = vmatprep.subr.bf16.mxu0 0
        %990 = vmatpush1.bf16.xpose.msra.mxu0 0
        %991 = vmatprep.subr.bf16.mxu0 0
        %992 = vmatpush1.bf16.xpose.msra.mxu0 %v975
        %993 = vmatprep.subr.bf16.mxu0 0
        %994 = vmatpush2.bf16.xpose.msra.mxu0 0
        %995 = vmatprep.subr.bf16.mxu0 0
        %996 = vmatpush2.bf16.xpose.msra.mxu0 0
        %997 = vmatprep.subr.bf16.mxu0 0
        %998 = vmatpush2.bf16.xpose.msra.mxu0 0
        %999 = vmatprep.subr.bf16.mxu0 0
        %1000 = vmatpush2.bf16.xpose.msra.mxu0 0
        %1001 = vmatprep.subr.bf16.mxu0 0
        %1002 = vmatpush2.bf16.xpose.msra.mxu0 0
        %1003 = vmatprep.subr.bf16.mxu0 0
        %1004 = vmatpush2.bf16.xpose.msra.mxu0 0
        %1005 = vmatprep.subr.bf16.mxu0 0
        %1006 = vmatpush2.bf16.xpose.msra.mxu0 0
        %1007 = vmatprep.subr.bf16.mxu0 0
        %1008 = vmatpush2.bf16.xpose.msra.mxu0 0
        %1009 = vmatprep.mubr.bf16.mxu0 0
        %1010 = vmatmul.mubr.bf16.gmra.mxu0 %v972
        %v1011 = vpop.f32.mrf.mxu0
        %v1012 = vadd.f32 %v515, %v1011
        %v1013 = vpop.f32.mrf.mxu0
        %v1014 = vpop.f32.mrf.mxu0
        %v1015 = vpop.f32.mrf.mxu0
        %1016 = vdwg.mxu0
        %v1018 = vsel %vm970, %v823, 0
        %v1021 = vsel %vm970, %v895, 0
        %1023 = vmatprep.subr.bf16.mxu0 0
        %1024 = vmatpush1.bf16.xpose.msra.mxu0 0
        %1025 = vmatprep.subr.bf16.mxu0 0
        %1026 = vmatpush1.bf16.xpose.msra.mxu0 0
        %1027 = vmatprep.subr.bf16.mxu0 0
        %1028 = vmatpush1.bf16.xpose.msra.mxu0 0
        %1029 = vmatprep.subr.bf16.mxu0 0
        %1030 = vmatpush1.bf16.xpose.msra.mxu0 0
        %1031 = vmatprep.subr.bf16.mxu0 0
        %1032 = vmatpush1.bf16.xpose.msra.mxu0 0
        %1033 = vmatprep.subr.bf16.mxu0 0
        %1034 = vmatpush1.bf16.xpose.msra.mxu0 0
        %1035 = vmatprep.subr.bf16.mxu0 0
        %1036 = vmatpush1.bf16.xpose.msra.mxu0 0
        %1037 = vmatprep.subr.bf16.mxu0 0
        %1038 = vmatpush1.bf16.xpose.msra.mxu0 %v1021
        %1039 = vmatprep.subr.bf16.mxu0 0
        %1040 = vmatpush2.bf16.xpose.msra.mxu0 0
        %1041 = vmatprep.subr.bf16.mxu0 0
        %1042 = vmatpush2.bf16.xpose.msra.mxu0 0
        %1043 = vmatprep.subr.bf16.mxu0 0
        %1044 = vmatpush2.bf16.xpose.msra.mxu0 0
        %1045 = vmatprep.subr.bf16.mxu0 0
        %1046 = vmatpush2.bf16.xpose.msra.mxu0 0
        %1047 = vmatprep.subr.bf16.mxu0 0
        %1048 = vmatpush2.bf16.xpose.msra.mxu0 0
        %1049 = vmatprep.subr.bf16.mxu0 0
        %1050 = vmatpush2.bf16.xpose.msra.mxu0 0
        %1051 = vmatprep.subr.bf16.mxu0 0
        %1052 = vmatpush2.bf16.xpose.msra.mxu0 0
        %1053 = vmatprep.subr.bf16.mxu0 0
        %1054 = vmatpush2.bf16.xpose.msra.mxu0 0
        %1055 = vmatprep.mubr.bf16.mxu0 0
        %1056 = vmatmul.mubr.bf16.gmra.mxu0 %v1018
        %v1057 = vpop.f32.mrf.mxu0
        %v1058 = vadd.f32 %v515, %v1057
        %v1059 = vpop.f32.mrf.mxu0
        %v1060 = vpop.f32.mrf.mxu0
        %v1061 = vpop.f32.mrf.mxu0
        %1062 = vdwg.mxu0
        %v1064 = vsel %vm970, %v824, 0
        %v1067 = vsel %vm970, %v896, 0
        %1069 = vmatprep.subr.bf16.mxu0 0
        %1070 = vmatpush1.bf16.xpose.msra.mxu0 0
        %1071 = vmatprep.subr.bf16.mxu0 0
        %1072 = vmatpush1.bf16.xpose.msra.mxu0 0
        %1073 = vmatprep.subr.bf16.mxu0 0
        %1074 = vmatpush1.bf16.xpose.msra.mxu0 0
        %1075 = vmatprep.subr.bf16.mxu0 0
        %1076 = vmatpush1.bf16.xpose.msra.mxu0 0
        %1077 = vmatprep.subr.bf16.mxu0 0
        %1078 = vmatpush1.bf16.xpose.msra.mxu0 0
        %1079 = vmatprep.subr.bf16.mxu0 0
        %1080 = vmatpush1.bf16.xpose.msra.mxu0 0
        %1081 = vmatprep.subr.bf16.mxu0 0
        %1082 = vmatpush1.bf16.xpose.msra.mxu0 0
        %1083 = vmatprep.subr.bf16.mxu0 0
        %1084 = vmatpush1.bf16.xpose.msra.mxu0 %v1067
        %1085 = vmatprep.subr.bf16.mxu0 0
        %1086 = vmatpush2.bf16.xpose.msra.mxu0 0
        %1087 = vmatprep.subr.bf16.mxu0 0
        %1088 = vmatpush2.bf16.xpose.msra.mxu0 0
        %1089 = vmatprep.subr.bf16.mxu0 0
        %1090 = vmatpush2.bf16.xpose.msra.mxu0 0
        %1091 = vmatprep.subr.bf16.mxu0 0
        %1092 = vmatpush2.bf16.xpose.msra.mxu0 0
        %1093 = vmatprep.subr.bf16.mxu0 0
        %1094 = vmatpush2.bf16.xpose.msra.mxu0 0
        %1095 = vmatprep.subr.bf16.mxu0 0
        %1096 = vmatpush2.bf16.xpose.msra.mxu0 0
        %1097 = vmatprep.subr.bf16.mxu0 0
        %1098 = vmatpush2.bf16.xpose.msra.mxu0 0
        %1099 = vmatprep.subr.bf16.mxu0 0
        %1100 = vmatpush2.bf16.xpose.msra.mxu0 0
        %1101 = vmatprep.mubr.bf16.mxu0 0
        %1102 = vmatmul.mubr.bf16.gmra.mxu0 %v1064
        %v1103 = vpop.f32.mrf.mxu0
        %v1104 = vadd.f32 %v515, %v1103
        %v1105 = vpop.f32.mrf.mxu0
        %v1106 = vpop.f32.mrf.mxu0
        %v1107 = vpop.f32.mrf.mxu0
        %1108 = vdwg.mxu0
        %v1110 = vsel %vm970, %v825, 0
        %v1113 = vsel %vm970, %v897, 0
        %1115 = vmatprep.subr.bf16.mxu0 0
        %1116 = vmatpush1.bf16.xpose.msra.mxu0 0
        %1117 = vmatprep.subr.bf16.mxu0 0
        %1118 = vmatpush1.bf16.xpose.msra.mxu0 0
        %1119 = vmatprep.subr.bf16.mxu0 0
        %1120 = vmatpush1.bf16.xpose.msra.mxu0 0
        %1121 = vmatprep.subr.bf16.mxu0 0
        %1122 = vmatpush1.bf16.xpose.msra.mxu0 0
        %1123 = vmatprep.subr.bf16.mxu0 0
        %1124 = vmatpush1.bf16.xpose.msra.mxu0 0
        %1125 = vmatprep.subr.bf16.mxu0 0
        %1126 = vmatpush1.bf16.xpose.msra.mxu0 0
        %1127 = vmatprep.subr.bf16.mxu0 0
        %1128 = vmatpush1.bf16.xpose.msra.mxu0 0
        %1129 = vmatprep.subr.bf16.mxu0 0
        %1130 = vmatpush1.bf16.xpose.msra.mxu0 %v1113
        %1131 = vmatprep.subr.bf16.mxu0 0
        %1132 = vmatpush2.bf16.xpose.msra.mxu0 0
        %1133 = vmatprep.subr.bf16.mxu0 0
        %1134 = vmatpush2.bf16.xpose.msra.mxu0 0
        %1135 = vmatprep.subr.bf16.mxu0 0
        %1136 = vmatpush2.bf16.xpose.msra.mxu0 0
        %1137 = vmatprep.subr.bf16.mxu0 0
        %1138 = vmatpush2.bf16.xpose.msra.mxu0 0
        %1139 = vmatprep.subr.bf16.mxu0 0
        %1140 = vmatpush2.bf16.xpose.msra.mxu0 0
        %1141 = vmatprep.subr.bf16.mxu0 0
        %1142 = vmatpush2.bf16.xpose.msra.mxu0 0
        %1143 = vmatprep.subr.bf16.mxu0 0
        %1144 = vmatpush2.bf16.xpose.msra.mxu0 0
        %1145 = vmatprep.subr.bf16.mxu0 0
        %1146 = vmatpush2.bf16.xpose.msra.mxu0 0
        %1147 = vmatprep.mubr.bf16.mxu0 0
        %1148 = vmatmul.mubr.bf16.gmra.mxu0 %v1110
        %v1149 = vpop.f32.mrf.mxu0
        %v1150 = vadd.f32 %v515, %v1149
        %v1151 = vpop.f32.mrf.mxu0
        %v1152 = vpop.f32.mrf.mxu0
        %v1153 = vpop.f32.mrf.mxu0
        %1154 = vdwg.mxu0
        %v1155 = vsel %vm970, %v1012, -inf
        %1156 = vmax.xlane.f32.xlu0 %v1155
        %v1157 = vpop.xlane.xlu0 %1156
        %v1158 = vsel %vm970, %v1058, -inf
        %1159 = vmax.xlane.f32.xlu0 %v1158
        %v1160 = vpop.xlane.xlu0 %1159
        %v1161 = vsel %vm970, %v1104, -inf
        %1162 = vmax.xlane.f32.xlu0 %v1161
        %v1163 = vpop.xlane.xlu0 %1162
        %v1164 = vsel %vm970, %v1150, -inf
        %1165 = vmax.xlane.f32.xlu0 %v1164
        %v1166 = vpop.xlane.xlu0 %1165
        %v1167 = vsub.f32 %v1012, %v1157
        %v1168 = vsub.f32 %v1058, %v1160
        %v1169 = vsub.f32 %v1104, %v1163
        %v1170 = vsub.f32 %v1150, %v1166
        %v1171 = vmul.f32 %v1167, 1.442695
        %v1172 = vpow.pop %v1171
        %v1173 = vmul.f32 %v1168, 1.442695
        %v1174 = vpow.pop %v1173
        %v1175 = vmul.f32 %v1169, 1.442695
        %v1176 = vpow.pop %v1175
        %v1177 = vmul.f32 %v1170, 1.442695
        %v1178 = vpow.pop %v1177
        %v1179 = vsel %vm970, %v1172, 0.0
        %1180 = vadd.xlane.f32.xlu0 %v1179
        %v1181 = vpop.xlane.xlu0 %1180
        %v1182 = vsel %vm970, %v1174, 0.0
        %1183 = vadd.xlane.f32.xlu0 %v1182
        %v1184 = vpop.xlane.xlu0 %1183
        %v1185 = vsel %vm970, %v1176, 0.0
        %1186 = vadd.xlane.f32.xlu0 %v1185
        %v1187 = vpop.xlane.xlu0 %1186
        %v1188 = vsel %vm970, %v1178, 0.0
        %1189 = vadd.xlane.f32.xlu0 %v1188
        %v1190 = vpop.xlane.xlu0 %1189
        %v1191 = vrcp.pop %v1181
        %v1192 = vmul.f32 %v1172, %v1191
        %v1193 = vrcp.pop %v1184
        %v1194 = vmul.f32 %v1174, %v1193
        %v1195 = vrcp.pop %v1187
        %v1196 = vmul.f32 %v1176, %v1195
        %v1197 = vrcp.pop %v1190
        %v1198 = vmul.f32 %v1178, %v1197
        %v1199 = vpack.c.bf16 %v1192, %v1192
        %v1200 = vpack.c.bf16 %v1194, %v1194
        %v1201 = vpack.c.bf16 %v1196, %v1196
        %v1202 = vpack.c.bf16 %v1198, %v1198
        %v1204 = vsel %vm970, %v1199, 0
        %vm1206 = vcmask 1043456
        %v1208 = vsel %vm1206, %v966, 0
        %1210 = vmatprep.subr.bf16.mxu0 0
        %1211 = vmatpush1.bf16.msra.mxu0 0
        %1212 = vmatprep.subr.bf16.mxu0 0
        %1213 = vmatpush1.bf16.msra.mxu0 0
        %1214 = vmatprep.subr.bf16.mxu0 0
        %1215 = vmatpush1.bf16.msra.mxu0 0
        %1216 = vmatprep.subr.bf16.mxu0 0
        %1217 = vmatpush1.bf16.msra.mxu0 0
        %1218 = vmatprep.subr.bf16.mxu0 0
        %1219 = vmatpush1.bf16.msra.mxu0 0
        %1220 = vmatprep.subr.bf16.mxu0 0
        %1221 = vmatpush1.bf16.msra.mxu0 0
        %1222 = vmatprep.subr.bf16.mxu0 0
        %1223 = vmatpush1.bf16.msra.mxu0 0
        %1224 = vmatprep.subr.bf16.mxu0 0
        %1225 = vmatpush1.bf16.msra.mxu0 %v1208
        %1226 = vmatprep.subr.bf16.mxu0 0
        %1227 = vmatpush2.bf16.msra.mxu0 0
        %1228 = vmatprep.subr.bf16.mxu0 0
        %1229 = vmatpush2.bf16.msra.mxu0 0
        %1230 = vmatprep.subr.bf16.mxu0 0
        %1231 = vmatpush2.bf16.msra.mxu0 0
        %1232 = vmatprep.subr.bf16.mxu0 0
        %1233 = vmatpush2.bf16.msra.mxu0 0
        %1234 = vmatprep.subr.bf16.mxu0 0
        %1235 = vmatpush2.bf16.msra.mxu0 0
        %1236 = vmatprep.subr.bf16.mxu0 0
        %1237 = vmatpush2.bf16.msra.mxu0 0
        %1238 = vmatprep.subr.bf16.mxu0 0
        %1239 = vmatpush2.bf16.msra.mxu0 0
        %1240 = vmatprep.subr.bf16.mxu0 0
        %1241 = vmatpush2.bf16.msra.mxu0 0
        %1242 = vmatprep.mubr.bf16.mxu0 0
        %1243 = vmatmul.mubr.bf16.gmra.mxu0 %v1204
        %v1244 = vpop.f32.mrf.mxu0
        %v1245 = vadd.f32 0.0, %v1244
        %v1246 = vpop.f32.mrf.mxu0
        %v1247 = vpop.f32.mrf.mxu0
        %v1248 = vpop.f32.mrf.mxu0
        %1249 = vdwg.mxu0
        %v1251 = vsel %vm970, %v1200, 0
        %v1254 = vsel %vm1206, %v967, 0
        %1256 = vmatprep.subr.bf16.mxu0 0
        %1257 = vmatpush1.bf16.msra.mxu0 0
        %1258 = vmatprep.subr.bf16.mxu0 0
        %1259 = vmatpush1.bf16.msra.mxu0 0
        %1260 = vmatprep.subr.bf16.mxu0 0
        %1261 = vmatpush1.bf16.msra.mxu0 0
        %1262 = vmatprep.subr.bf16.mxu0 0
        %1263 = vmatpush1.bf16.msra.mxu0 0
        %1264 = vmatprep.subr.bf16.mxu0 0
        %1265 = vmatpush1.bf16.msra.mxu0 0
        %1266 = vmatprep.subr.bf16.mxu0 0
        %1267 = vmatpush1.bf16.msra.mxu0 0
        %1268 = vmatprep.subr.bf16.mxu0 0
        %1269 = vmatpush1.bf16.msra.mxu0 0
        %1270 = vmatprep.subr.bf16.mxu0 0
        %1271 = vmatpush1.bf16.msra.mxu0 %v1254
        %1272 = vmatprep.subr.bf16.mxu0 0
        %1273 = vmatpush2.bf16.msra.mxu0 0
        %1274 = vmatprep.subr.bf16.mxu0 0
        %1275 = vmatpush2.bf16.msra.mxu0 0
        %1276 = vmatprep.subr.bf16.mxu0 0
        %1277 = vmatpush2.bf16.msra.mxu0 0
        %1278 = vmatprep.subr.bf16.mxu0 0
        %1279 = vmatpush2.bf16.msra.mxu0 0
        %1280 = vmatprep.subr.bf16.mxu0 0
        %1281 = vmatpush2.bf16.msra.mxu0 0
        %1282 = vmatprep.subr.bf16.mxu0 0
        %1283 = vmatpush2.bf16.msra.mxu0 0
        %1284 = vmatprep.subr.bf16.mxu0 0
        %1285 = vmatpush2.bf16.msra.mxu0 0
        %1286 = vmatprep.subr.bf16.mxu0 0
        %1287 = vmatpush2.bf16.msra.mxu0 0
        %1288 = vmatprep.mubr.bf16.mxu0 0
        %1289 = vmatmul.mubr.bf16.gmra.mxu0 %v1251
        %v1290 = vpop.f32.mrf.mxu0
        %v1291 = vadd.f32 0.0, %v1290
        %v1292 = vpop.f32.mrf.mxu0
        %v1293 = vpop.f32.mrf.mxu0
        %v1294 = vpop.f32.mrf.mxu0
        %1295 = vdwg.mxu0
        %v1297 = vsel %vm970, %v1201, 0
        %v1300 = vsel %vm1206, %v968, 0
        %1302 = vmatprep.subr.bf16.mxu0 0
        %1303 = vmatpush1.bf16.msra.mxu0 0
        %1304 = vmatprep.subr.bf16.mxu0 0
        %1305 = vmatpush1.bf16.msra.mxu0 0
        %1306 = vmatprep.subr.bf16.mxu0 0
        %1307 = vmatpush1.bf16.msra.mxu0 0
        %1308 = vmatprep.subr.bf16.mxu0 0
        %1309 = vmatpush1.bf16.msra.mxu0 0
        %1310 = vmatprep.subr.bf16.mxu0 0
        %1311 = vmatpush1.bf16.msra.mxu0 0
        %1312 = vmatprep.subr.bf16.mxu0 0
        %1313 = vmatpush1.bf16.msra.mxu0 0
        %1314 = vmatprep.subr.bf16.mxu0 0
        %1315 = vmatpush1.bf16.msra.mxu0 0
        %1316 = vmatprep.subr.bf16.mxu0 0
        %1317 = vmatpush1.bf16.msra.mxu0 %v1300
        %1318 = vmatprep.subr.bf16.mxu0 0
        %1319 = vmatpush2.bf16.msra.mxu0 0
        %1320 = vmatprep.subr.bf16.mxu0 0
        %1321 = vmatpush2.bf16.msra.mxu0 0
        %1322 = vmatprep.subr.bf16.mxu0 0
        %1323 = vmatpush2.bf16.msra.mxu0 0
        %1324 = vmatprep.subr.bf16.mxu0 0
        %1325 = vmatpush2.bf16.msra.mxu0 0
        %1326 = vmatprep.subr.bf16.mxu0 0
        %1327 = vmatpush2.bf16.msra.mxu0 0
        %1328 = vmatprep.subr.bf16.mxu0 0
        %1329 = vmatpush2.bf16.msra.mxu0 0
        %1330 = vmatprep.subr.bf16.mxu0 0
        %1331 = vmatpush2.bf16.msra.mxu0 0
        %1332 = vmatprep.subr.bf16.mxu0 0
        %1333 = vmatpush2.bf16.msra.mxu0 0
        %1334 = vmatprep.mubr.bf16.mxu0 0
        %1335 = vmatmul.mubr.bf16.gmra.mxu0 %v1297
        %v1336 = vpop.f32.mrf.mxu0
        %v1337 = vadd.f32 0.0, %v1336
        %v1338 = vpop.f32.mrf.mxu0
        %v1339 = vpop.f32.mrf.mxu0
        %v1340 = vpop.f32.mrf.mxu0
        %1341 = vdwg.mxu0
        %v1343 = vsel %vm970, %v1202, 0
        %v1346 = vsel %vm1206, %v969, 0
        %1348 = vmatprep.subr.bf16.mxu0 0
        %1349 = vmatpush1.bf16.msra.mxu0 0
        %1350 = vmatprep.subr.bf16.mxu0 0
        %1351 = vmatpush1.bf16.msra.mxu0 0
        %1352 = vmatprep.subr.bf16.mxu0 0
        %1353 = vmatpush1.bf16.msra.mxu0 0
        %1354 = vmatprep.subr.bf16.mxu0 0
        %1355 = vmatpush1.bf16.msra.mxu0 0
        %1356 = vmatprep.subr.bf16.mxu0 0
        %1357 = vmatpush1.bf16.msra.mxu0 0
        %1358 = vmatprep.subr.bf16.mxu0 0
        %1359 = vmatpush1.bf16.msra.mxu0 0
        %1360 = vmatprep.subr.bf16.mxu0 0
        %1361 = vmatpush1.bf16.msra.mxu0 0
        %1362 = vmatprep.subr.bf16.mxu0 0
        %1363 = vmatpush1.bf16.msra.mxu0 %v1346
        %1364 = vmatprep.subr.bf16.mxu0 0
        %1365 = vmatpush2.bf16.msra.mxu0 0
        %1366 = vmatprep.subr.bf16.mxu0 0
        %1367 = vmatpush2.bf16.msra.mxu0 0
        %1368 = vmatprep.subr.bf16.mxu0 0
        %1369 = vmatpush2.bf16.msra.mxu0 0
        %1370 = vmatprep.subr.bf16.mxu0 0
        %1371 = vmatpush2.bf16.msra.mxu0 0
        %1372 = vmatprep.subr.bf16.mxu0 0
        %1373 = vmatpush2.bf16.msra.mxu0 0
        %1374 = vmatprep.subr.bf16.mxu0 0
        %1375 = vmatpush2.bf16.msra.mxu0 0
        %1376 = vmatprep.subr.bf16.mxu0 0
        %1377 = vmatpush2.bf16.msra.mxu0 0
        %1378 = vmatprep.subr.bf16.mxu0 0
        %1379 = vmatpush2.bf16.msra.mxu0 0
        %1380 = vmatprep.mubr.bf16.mxu0 0
        %1381 = vmatmul.mubr.bf16.gmra.mxu0 %v1343
        %v1382 = vpop.f32.mrf.mxu0
        %v1383 = vadd.f32 0.0, %v1382
        %v1384 = vpop.f32.mrf.mxu0
        %v1385 = vpop.f32.mrf.mxu0
        %v1386 = vpop.f32.mrf.mxu0
        %1387 = vdwg.mxu0
        %v1388 = vcombine.low %v1245, %v1337
        %v1389 = vcombine.high %v1245, %v1337
        %v1391 = vunpack.c.l.s4 1983009808
        %v1392 = vunpack.c.0.s8 %v1391
        %v1393 = vlaneseq
        %v1394 = vshrl.u32 %v1393, 7
        %v1395 = vsub.s32 %v1392, %v1394
        %v1396 = vrot.slane %v1388, %v1395
        %v1398 = vunpack.c.l.s4 1983009808
        %v1399 = vunpack.c.0.s8 %v1398
        %v1400 = vlaneseq
        %v1401 = vshrl.u32 %v1400, 7
        %v1402 = vsub.s32 %v1399, %v1401
        %v1403 = vrot.slane %v1389, %v1402
        %v1404 = vcombine.low %v1291, %v1383
        %v1405 = vcombine.high %v1291, %v1383
        %v1407 = vunpack.c.l.s4 1983009808
        %v1408 = vunpack.c.0.s8 %v1407
        %v1409 = vlaneseq
        %v1410 = vshrl.u32 %v1409, 7
        %v1411 = vsub.s32 %v1408, %v1410
        %v1412 = vrot.slane %v1404, %v1411
        %v1414 = vunpack.c.l.s4 1983009808
        %v1415 = vunpack.c.0.s8 %v1414
        %v1416 = vlaneseq
        %v1417 = vshrl.u32 %v1416, 7
        %v1418 = vsub.s32 %v1415, %v1417
        %v1419 = vrot.slane %v1405, %v1418
        %v1420 = vcombine.low %v1396, %v1412
        %v1421 = vcombine.high %v1396, %v1412
        %v1423 = vunpack.c.l.s4 1934713408
        %v1424 = vunpack.c.0.s8 %v1423
        %v1425 = vlaneseq
        %v1426 = vshrl.u32 %v1425, 7
        %v1427 = vsub.s32 %v1424, %v1426
        %v1428 = vrot.slane %v1420, %v1427
        %v1430 = vunpack.c.l.s4 1934713408
        %v1431 = vunpack.c.0.s8 %v1430
        %v1432 = vlaneseq
        %v1433 = vshrl.u32 %v1432, 7
        %v1434 = vsub.s32 %v1431, %v1433
        %v1435 = vrot.slane %v1421, %v1434
        %v1436 = vcombine.low %v1403, %v1419
        %v1437 = vcombine.high %v1403, %v1419
        %v1439 = vunpack.c.l.s4 1934713408
        %v1440 = vunpack.c.0.s8 %v1439
        %v1441 = vlaneseq
        %v1442 = vshrl.u32 %v1441, 7
        %v1443 = vsub.s32 %v1440, %v1442
        %v1444 = vrot.slane %v1436, %v1443
        %v1446 = vunpack.c.l.s4 1934713408
        %v1447 = vunpack.c.0.s8 %v1446
        %v1448 = vlaneseq
        %v1449 = vshrl.u32 %v1448, 7
        %v1450 = vsub.s32 %v1447, %v1449
        %v1451 = vrot.slane %v1437, %v1450
        %v1452 = vcombine.high %v1428, 0.0
        %v1453 = vcombine.high %v1435, 0.0
        %v1454 = vcombine.high %v1444, 0.0
        %v1455 = vcombine.high %v1451, 0.0
        %v1456 = vcombine.low %v1428, %v1435
        %v1458 = vunpack.c.l.s4 1983009808
        %v1459 = vunpack.c.0.s8 %v1458
        %v1460 = vlaneseq
        %v1461 = vshrl.u32 %v1460, 7
        %v1462 = vsub.s32 %v1459, %v1461
        %v1463 = vrot.slane %v1456, %v1462
        %v1464 = vcombine.low %v1452, %v1453
        %v1466 = vunpack.c.l.s4 1983009808
        %v1467 = vunpack.c.0.s8 %v1466
        %v1468 = vlaneseq
        %v1469 = vshrl.u32 %v1468, 7
        %v1470 = vsub.s32 %v1467, %v1469
        %v1471 = vrot.slane %v1464, %v1470
        %v1472 = vcombine.low %v1444, %v1451
        %v1474 = vunpack.c.l.s4 1983009808
        %v1475 = vunpack.c.0.s8 %v1474
        %v1476 = vlaneseq
        %v1477 = vshrl.u32 %v1476, 7
        %v1478 = vsub.s32 %v1475, %v1477
        %v1479 = vrot.slane %v1472, %v1478
        %v1480 = vcombine.low %v1454, %v1455
        %v1482 = vunpack.c.l.s4 1983009808
        %v1483 = vunpack.c.0.s8 %v1482
        %v1484 = vlaneseq
        %v1485 = vshrl.u32 %v1484, 7
        %v1486 = vsub.s32 %v1483, %v1485
        %v1487 = vrot.slane %v1480, %v1486
        %v1488 = vcombine.low %v1463, %v1471
        %v1489 = vcombine.high %v1463, %v1471
        %v1491 = vunpack.c.l.s4 1934713408
        %v1492 = vunpack.c.0.s8 %v1491
        %v1493 = vlaneseq
        %v1494 = vshrl.u32 %v1493, 7
        %v1495 = vsub.s32 %v1492, %v1494
        %v1496 = vrot.slane %v1488, %v1495
        %v1498 = vunpack.c.l.s4 1934713408
        %v1499 = vunpack.c.0.s8 %v1498
        %v1500 = vlaneseq
        %v1501 = vshrl.u32 %v1500, 7
        %v1502 = vsub.s32 %v1499, %v1501
        %v1503 = vrot.slane %v1489, %v1502
        %v1504 = vcombine.low %v1479, %v1487
        %v1505 = vcombine.high %v1479, %v1487
        %v1507 = vunpack.c.l.s4 1934713408
        %v1508 = vunpack.c.0.s8 %v1507
        %v1509 = vlaneseq
        %v1510 = vshrl.u32 %v1509, 7
        %v1511 = vsub.s32 %v1508, %v1510
        %v1512 = vrot.slane %v1504, %v1511
        %v1514 = vunpack.c.l.s4 1934713408
        %v1515 = vunpack.c.0.s8 %v1514
        %v1516 = vlaneseq
        %v1517 = vshrl.u32 %v1516, 7
        %v1518 = vsub.s32 %v1515, %v1517
        %v1519 = vrot.slane %v1505, %v1518
        %v1520 = vcombine.low %v1496, %v1512
        %v1521 = vcombine.high %v1496, %v1512
        %v1522 = vcombine.low %v1503, %v1519
        %v1523 = vcombine.high %v1503, %v1519
        %1525 = vrot.lane.b32.xlu0 %v1521, 8
        %v1526 = vpop.permute.xlu0 %1525
        %1529 = vrot.lane.b32.xlu0 %v1522, 16
        %v1530 = vpop.permute.xlu0 %1529
        %1533 = vrot.lane.b32.xlu0 %v1523, 24
        %v1534 = vpop.permute.xlu0 %1533
        %v1536 = vsel %vm970, %v1520, %v1526
        %vm1537 = vcmask 130048
        %v1538 = vsel %vm1537, %v1536, %v1530
        %vm1539 = vcmask 195584
        %v1540 = vsel %vm1539, %v1538, %v1534
        %1542 = vrot.lane.b32.xlu0 %v507, 120
        %v1543 = vpop.permute.xlu0 %1542
        %1545 = vrot.lane.b32.xlu0 %v507, 112
        %v1546 = vpop.permute.xlu0 %1545
        %1548 = vrot.lane.b32.xlu0 %v507, 104
        %v1549 = vpop.permute.xlu0 %1548
        %v1551 = vcombine.low %v507, %v1546
        %v1552 = vcombine.high %v507, %v1546
        %v1554 = vunpack.c.l.s4 1983009808
        %v1555 = vunpack.c.0.s8 %v1554
        %v1556 = vlaneseq
        %v1557 = vshrl.u32 %v1556, 7
        %v1558 = vsub.s32 %v1555, %v1557
        %v1559 = vrot.slane %v1551, %v1558
        %v1561 = vunpack.c.l.s4 1983009808
        %v1562 = vunpack.c.0.s8 %v1561
        %v1563 = vlaneseq
        %v1564 = vshrl.u32 %v1563, 7
        %v1565 = vsub.s32 %v1562, %v1564
        %v1566 = vrot.slane %v1552, %v1565
        %v1567 = vcombine.low %v1543, %v1549
        %v1568 = vcombine.high %v1543, %v1549
        %v1570 = vunpack.c.l.s4 1983009808
        %v1571 = vunpack.c.0.s8 %v1570
        %v1572 = vlaneseq
        %v1573 = vshrl.u32 %v1572, 7
        %v1574 = vsub.s32 %v1571, %v1573
        %v1575 = vrot.slane %v1567, %v1574
        %v1577 = vunpack.c.l.s4 1983009808
        %v1578 = vunpack.c.0.s8 %v1577
        %v1579 = vlaneseq
        %v1580 = vshrl.u32 %v1579, 7
        %v1581 = vsub.s32 %v1578, %v1580
        %v1582 = vrot.slane %v1568, %v1581
        %v1583 = vcombine.low %v1559, %v1575
        %v1584 = vcombine.high %v1559, %v1575
        %v1586 = vunpack.c.l.s4 1934713408
        %v1587 = vunpack.c.0.s8 %v1586
        %v1588 = vlaneseq
        %v1589 = vshrl.u32 %v1588, 7
        %v1590 = vsub.s32 %v1587, %v1589
        %v1591 = vrot.slane %v1583, %v1590
        %v1593 = vunpack.c.l.s4 1934713408
        %v1594 = vunpack.c.0.s8 %v1593
        %v1595 = vlaneseq
        %v1596 = vshrl.u32 %v1595, 7
        %v1597 = vsub.s32 %v1594, %v1596
        %v1598 = vrot.slane %v1584, %v1597
        %v1599 = vcombine.low %v1566, %v1582
        %v1600 = vcombine.high %v1566, %v1582
        %v1602 = vunpack.c.l.s4 1934713408
        %v1603 = vunpack.c.0.s8 %v1602
        %v1604 = vlaneseq
        %v1605 = vshrl.u32 %v1604, 7
        %v1606 = vsub.s32 %v1603, %v1605
        %v1607 = vrot.slane %v1599, %v1606
        %v1609 = vunpack.c.l.s4 1934713408
        %v1610 = vunpack.c.0.s8 %v1609
        %v1611 = vlaneseq
        %v1612 = vshrl.u32 %v1611, 7
        %v1613 = vsub.s32 %v1610, %v1612
        %v1614 = vrot.slane %v1600, %v1613
        %v1615 = vcombine.high %v1591, 0.0
        %v1616 = vcombine.high %v1598, 0.0
        %v1617 = vcombine.high %v1607, 0.0
        %v1618 = vcombine.high %v1614, 0.0
        %1619 = vrot.lane.b32.xlu0 %v507, 96
        %v1620 = vpop.permute.xlu0 %1619
        %1621 = vrot.lane.b32.xlu0 %v1543, 96
        %v1622 = vpop.permute.xlu0 %1621
        %1623 = vrot.lane.b32.xlu0 %v1546, 96
        %v1624 = vpop.permute.xlu0 %1623
        %1625 = vrot.lane.b32.xlu0 %v1549, 96
        %v1626 = vpop.permute.xlu0 %1625
        %v1631 = vcombine.low %v1620, %v1624
        %v1632 = vcombine.high %v1620, %v1624
        %v1634 = vunpack.c.l.s4 1983009808
        %v1635 = vunpack.c.0.s8 %v1634
        %v1636 = vlaneseq
        %v1637 = vshrl.u32 %v1636, 7
        %v1638 = vsub.s32 %v1635, %v1637
        %v1639 = vrot.slane %v1631, %v1638
        %v1641 = vunpack.c.l.s4 1983009808
        %v1642 = vunpack.c.0.s8 %v1641
        %v1643 = vlaneseq
        %v1644 = vshrl.u32 %v1643, 7
        %v1645 = vsub.s32 %v1642, %v1644
        %v1646 = vrot.slane %v1632, %v1645
        %v1647 = vcombine.low %v1622, %v1626
        %v1648 = vcombine.high %v1622, %v1626
        %v1650 = vunpack.c.l.s4 1983009808
        %v1651 = vunpack.c.0.s8 %v1650
        %v1652 = vlaneseq
        %v1653 = vshrl.u32 %v1652, 7
        %v1654 = vsub.s32 %v1651, %v1653
        %v1655 = vrot.slane %v1647, %v1654
        %v1657 = vunpack.c.l.s4 1983009808
        %v1658 = vunpack.c.0.s8 %v1657
        %v1659 = vlaneseq
        %v1660 = vshrl.u32 %v1659, 7
        %v1661 = vsub.s32 %v1658, %v1660
        %v1662 = vrot.slane %v1648, %v1661
        %v1663 = vcombine.low %v1639, %v1655
        %v1664 = vcombine.high %v1639, %v1655
        %v1666 = vunpack.c.l.s4 1934713408
        %v1667 = vunpack.c.0.s8 %v1666
        %v1668 = vlaneseq
        %v1669 = vshrl.u32 %v1668, 7
        %v1670 = vsub.s32 %v1667, %v1669
        %v1671 = vrot.slane %v1663, %v1670
        %v1673 = vunpack.c.l.s4 1934713408
        %v1674 = vunpack.c.0.s8 %v1673
        %v1675 = vlaneseq
        %v1676 = vshrl.u32 %v1675, 7
        %v1677 = vsub.s32 %v1674, %v1676
        %v1678 = vrot.slane %v1664, %v1677
        %v1679 = vcombine.low %v1646, %v1662
        %v1680 = vcombine.high %v1646, %v1662
        %v1682 = vunpack.c.l.s4 1934713408
        %v1683 = vunpack.c.0.s8 %v1682
        %v1684 = vlaneseq
        %v1685 = vshrl.u32 %v1684, 7
        %v1686 = vsub.s32 %v1683, %v1685
        %v1687 = vrot.slane %v1679, %v1686
        %v1689 = vunpack.c.l.s4 1934713408
        %v1690 = vunpack.c.0.s8 %v1689
        %v1691 = vlaneseq
        %v1692 = vshrl.u32 %v1691, 7
        %v1693 = vsub.s32 %v1690, %v1692
        %v1694 = vrot.slane %v1680, %v1693
        %v1695 = vcombine.high %v1671, 0.0
        %v1696 = vcombine.high %v1678, 0.0
        %v1697 = vcombine.high %v1687, 0.0
        %v1698 = vcombine.high %v1694, 0.0
        %1699 = vrot.lane.b32.xlu0 %v507, 64
        %v1700 = vpop.permute.xlu0 %1699
        %1701 = vrot.lane.b32.xlu0 %v1543, 64
        %v1702 = vpop.permute.xlu0 %1701
        %1703 = vrot.lane.b32.xlu0 %v1546, 64
        %v1704 = vpop.permute.xlu0 %1703
        %1705 = vrot.lane.b32.xlu0 %v1549, 64
        %v1706 = vpop.permute.xlu0 %1705
        %v1711 = vcombine.low %v1700, %v1704
        %v1712 = vcombine.high %v1700, %v1704
        %v1714 = vunpack.c.l.s4 1983009808
        %v1715 = vunpack.c.0.s8 %v1714
        %v1716 = vlaneseq
        %v1717 = vshrl.u32 %v1716, 7
        %v1718 = vsub.s32 %v1715, %v1717
        %v1719 = vrot.slane %v1711, %v1718
        %v1721 = vunpack.c.l.s4 1983009808
        %v1722 = vunpack.c.0.s8 %v1721
        %v1723 = vlaneseq
        %v1724 = vshrl.u32 %v1723, 7
        %v1725 = vsub.s32 %v1722, %v1724
        %v1726 = vrot.slane %v1712, %v1725
        %v1727 = vcombine.low %v1702, %v1706
        %v1728 = vcombine.high %v1702, %v1706
        %v1730 = vunpack.c.l.s4 1983009808
        %v1731 = vunpack.c.0.s8 %v1730
        %v1732 = vlaneseq
        %v1733 = vshrl.u32 %v1732, 7
        %v1734 = vsub.s32 %v1731, %v1733
        %v1735 = vrot.slane %v1727, %v1734
        %v1737 = vunpack.c.l.s4 1983009808
        %v1738 = vunpack.c.0.s8 %v1737
        %v1739 = vlaneseq
        %v1740 = vshrl.u32 %v1739, 7
        %v1741 = vsub.s32 %v1738, %v1740
        %v1742 = vrot.slane %v1728, %v1741
        %v1743 = vcombine.low %v1719, %v1735
        %v1744 = vcombine.high %v1719, %v1735
        %v1746 = vunpack.c.l.s4 1934713408
        %v1747 = vunpack.c.0.s8 %v1746
        %v1748 = vlaneseq
        %v1749 = vshrl.u32 %v1748, 7
        %v1750 = vsub.s32 %v1747, %v1749
        %v1751 = vrot.slane %v1743, %v1750
        %v1753 = vunpack.c.l.s4 1934713408
        %v1754 = vunpack.c.0.s8 %v1753
        %v1755 = vlaneseq
        %v1756 = vshrl.u32 %v1755, 7
        %v1757 = vsub.s32 %v1754, %v1756
        %v1758 = vrot.slane %v1744, %v1757
        %v1759 = vcombine.low %v1726, %v1742
        %v1760 = vcombine.high %v1726, %v1742
        %v1762 = vunpack.c.l.s4 1934713408
        %v1763 = vunpack.c.0.s8 %v1762
        %v1764 = vlaneseq
        %v1765 = vshrl.u32 %v1764, 7
        %v1766 = vsub.s32 %v1763, %v1765
        %v1767 = vrot.slane %v1759, %v1766
        %v1769 = vunpack.c.l.s4 1934713408
        %v1770 = vunpack.c.0.s8 %v1769
        %v1771 = vlaneseq
        %v1772 = vshrl.u32 %v1771, 7
        %v1773 = vsub.s32 %v1770, %v1772
        %v1774 = vrot.slane %v1760, %v1773
        %v1775 = vcombine.high %v1751, 0.0
        %v1776 = vcombine.high %v1758, 0.0
        %v1777 = vcombine.high %v1767, 0.0
        %v1778 = vcombine.high %v1774, 0.0
        %v1779 = vcombine.low %v1591, %v1598
        %v1781 = vunpack.c.l.s4 1983009808
        %v1782 = vunpack.c.0.s8 %v1781
        %v1783 = vlaneseq
        %v1784 = vshrl.u32 %v1783, 7
        %v1785 = vsub.s32 %v1782, %v1784
        %v1786 = vrot.slane %v1779, %v1785
        %v1787 = vcombine.low %v1615, %v1616
        %v1789 = vunpack.c.l.s4 1983009808
        %v1790 = vunpack.c.0.s8 %v1789
        %v1791 = vlaneseq
        %v1792 = vshrl.u32 %v1791, 7
        %v1793 = vsub.s32 %v1790, %v1792
        %v1794 = vrot.slane %v1787, %v1793
        %v1795 = vcombine.low %v1607, %v1614
        %v1797 = vunpack.c.l.s4 1983009808
        %v1798 = vunpack.c.0.s8 %v1797
        %v1799 = vlaneseq
        %v1800 = vshrl.u32 %v1799, 7
        %v1801 = vsub.s32 %v1798, %v1800
        %v1802 = vrot.slane %v1795, %v1801
        %v1803 = vcombine.low %v1617, %v1618
        %v1805 = vunpack.c.l.s4 1983009808
        %v1806 = vunpack.c.0.s8 %v1805
        %v1807 = vlaneseq
        %v1808 = vshrl.u32 %v1807, 7
        %v1809 = vsub.s32 %v1806, %v1808
        %v1810 = vrot.slane %v1803, %v1809
        %v1811 = vcombine.low %v1786, %v1794
        %v1812 = vcombine.high %v1786, %v1794
        %v1814 = vunpack.c.l.s4 1934713408
        %v1815 = vunpack.c.0.s8 %v1814
        %v1816 = vlaneseq
        %v1817 = vshrl.u32 %v1816, 7
        %v1818 = vsub.s32 %v1815, %v1817
        %v1819 = vrot.slane %v1811, %v1818
        %v1821 = vunpack.c.l.s4 1934713408
        %v1822 = vunpack.c.0.s8 %v1821
        %v1823 = vlaneseq
        %v1824 = vshrl.u32 %v1823, 7
        %v1825 = vsub.s32 %v1822, %v1824
        %v1826 = vrot.slane %v1812, %v1825
        %v1827 = vcombine.low %v1802, %v1810
        %v1828 = vcombine.high %v1802, %v1810
        %v1830 = vunpack.c.l.s4 1934713408
        %v1831 = vunpack.c.0.s8 %v1830
        %v1832 = vlaneseq
        %v1833 = vshrl.u32 %v1832, 7
        %v1834 = vsub.s32 %v1831, %v1833
        %v1835 = vrot.slane %v1827, %v1834
        %v1837 = vunpack.c.l.s4 1934713408
        %v1838 = vunpack.c.0.s8 %v1837
        %v1839 = vlaneseq
        %v1840 = vshrl.u32 %v1839, 7
        %v1841 = vsub.s32 %v1838, %v1840
        %v1842 = vrot.slane %v1828, %v1841
        %v1843 = vcombine.low %v1819, %v1835
        %v1844 = vcombine.high %v1819, %v1835
        %v1845 = vcombine.low %v1826, %v1842
        %v1846 = vcombine.high %v1826, %v1842
        %v1847 = vpack.c.bf16 %v1843, %v1843
        %v1848 = vpack.c.bf16 %v1844, %v1844
        %v1849 = vpack.c.bf16 %v1845, %v1845
        %v1850 = vpack.c.bf16 %v1846, %v1846
        %v1851 = vcombine.low %v1671, %v1678
        %v1853 = vunpack.c.l.s4 1983009808
        %v1854 = vunpack.c.0.s8 %v1853
        %v1855 = vlaneseq
        %v1856 = vshrl.u32 %v1855, 7
        %v1857 = vsub.s32 %v1854, %v1856
        %v1858 = vrot.slane %v1851, %v1857
        %v1859 = vcombine.low %v1695, %v1696
        %v1861 = vunpack.c.l.s4 1983009808
        %v1862 = vunpack.c.0.s8 %v1861
        %v1863 = vlaneseq
        %v1864 = vshrl.u32 %v1863, 7
        %v1865 = vsub.s32 %v1862, %v1864
        %v1866 = vrot.slane %v1859, %v1865
        %v1867 = vcombine.low %v1687, %v1694
        %v1869 = vunpack.c.l.s4 1983009808
        %v1870 = vunpack.c.0.s8 %v1869
        %v1871 = vlaneseq
        %v1872 = vshrl.u32 %v1871, 7
        %v1873 = vsub.s32 %v1870, %v1872
        %v1874 = vrot.slane %v1867, %v1873
        %v1875 = vcombine.low %v1697, %v1698
        %v1877 = vunpack.c.l.s4 1983009808
        %v1878 = vunpack.c.0.s8 %v1877
        %v1879 = vlaneseq
        %v1880 = vshrl.u32 %v1879, 7
        %v1881 = vsub.s32 %v1878, %v1880
        %v1882 = vrot.slane %v1875, %v1881
        %v1883 = vcombine.low %v1858, %v1866
        %v1884 = vcombine.high %v1858, %v1866
        %v1886 = vunpack.c.l.s4 1934713408
        %v1887 = vunpack.c.0.s8 %v1886
        %v1888 = vlaneseq
        %v1889 = vshrl.u32 %v1888, 7
        %v1890 = vsub.s32 %v1887, %v1889
        %v1891 = vrot.slane %v1883, %v1890
        %v1893 = vunpack.c.l.s4 1934713408
        %v1894 = vunpack.c.0.s8 %v1893
        %v1895 = vlaneseq
        %v1896 = vshrl.u32 %v1895, 7
        %v1897 = vsub.s32 %v1894, %v1896
        %v1898 = vrot.slane %v1884, %v1897
        %v1899 = vcombine.low %v1874, %v1882
        %v1900 = vcombine.high %v1874, %v1882
        %v1902 = vunpack.c.l.s4 1934713408
        %v1903 = vunpack.c.0.s8 %v1902
        %v1904 = vlaneseq
        %v1905 = vshrl.u32 %v1904, 7
        %v1906 = vsub.s32 %v1903, %v1905
        %v1907 = vrot.slane %v1899, %v1906
        %v1909 = vunpack.c.l.s4 1934713408
        %v1910 = vunpack.c.0.s8 %v1909
        %v1911 = vlaneseq
        %v1912 = vshrl.u32 %v1911, 7
        %v1913 = vsub.s32 %v1910, %v1912
        %v1914 = vrot.slane %v1900, %v1913
        %v1915 = vcombine.low %v1891, %v1907
        %v1916 = vcombine.high %v1891, %v1907
        %v1917 = vcombine.low %v1898, %v1914
        %v1918 = vcombine.high %v1898, %v1914
        %v1919 = vpack.c.bf16 %v1915, %v1915
        %v1920 = vpack.c.bf16 %v1916, %v1916
        %v1921 = vpack.c.bf16 %v1917, %v1917
        %v1922 = vpack.c.bf16 %v1918, %v1918
        %v1923 = vcombine.low %v1751, %v1758
        %v1925 = vunpack.c.l.s4 1983009808
        %v1926 = vunpack.c.0.s8 %v1925
        %v1927 = vlaneseq
        %v1928 = vshrl.u32 %v1927, 7
        %v1929 = vsub.s32 %v1926, %v1928
        %v1930 = vrot.slane %v1923, %v1929
        %v1931 = vcombine.low %v1775, %v1776
        %v1933 = vunpack.c.l.s4 1983009808
        %v1934 = vunpack.c.0.s8 %v1933
        %v1935 = vlaneseq
        %v1936 = vshrl.u32 %v1935, 7
        %v1937 = vsub.s32 %v1934, %v1936
        %v1938 = vrot.slane %v1931, %v1937
        %v1939 = vcombine.low %v1767, %v1774
        %v1941 = vunpack.c.l.s4 1983009808
        %v1942 = vunpack.c.0.s8 %v1941
        %v1943 = vlaneseq
        %v1944 = vshrl.u32 %v1943, 7
        %v1945 = vsub.s32 %v1942, %v1944
        %v1946 = vrot.slane %v1939, %v1945
        %v1947 = vcombine.low %v1777, %v1778
        %v1949 = vunpack.c.l.s4 1983009808
        %v1950 = vunpack.c.0.s8 %v1949
        %v1951 = vlaneseq
        %v1952 = vshrl.u32 %v1951, 7
        %v1953 = vsub.s32 %v1950, %v1952
        %v1954 = vrot.slane %v1947, %v1953
        %v1955 = vcombine.low %v1930, %v1938
        %v1956 = vcombine.high %v1930, %v1938
        %v1958 = vunpack.c.l.s4 1934713408
        %v1959 = vunpack.c.0.s8 %v1958
        %v1960 = vlaneseq
        %v1961 = vshrl.u32 %v1960, 7
        %v1962 = vsub.s32 %v1959, %v1961
        %v1963 = vrot.slane %v1955, %v1962
        %v1965 = vunpack.c.l.s4 1934713408
        %v1966 = vunpack.c.0.s8 %v1965
        %v1967 = vlaneseq
        %v1968 = vshrl.u32 %v1967, 7
        %v1969 = vsub.s32 %v1966, %v1968
        %v1970 = vrot.slane %v1956, %v1969
        %v1971 = vcombine.low %v1946, %v1954
        %v1972 = vcombine.high %v1946, %v1954
        %v1974 = vunpack.c.l.s4 1934713408
        %v1975 = vunpack.c.0.s8 %v1974
        %v1976 = vlaneseq
        %v1977 = vshrl.u32 %v1976, 7
        %v1978 = vsub.s32 %v1975, %v1977
        %v1979 = vrot.slane %v1971, %v1978
        %v1981 = vunpack.c.l.s4 1934713408
        %v1982 = vunpack.c.0.s8 %v1981
        %v1983 = vlaneseq
        %v1984 = vshrl.u32 %v1983, 7
        %v1985 = vsub.s32 %v1982, %v1984
        %v1986 = vrot.slane %v1972, %v1985
        %v1987 = vcombine.low %v1963, %v1979
        %v1988 = vcombine.high %v1963, %v1979
        %v1989 = vcombine.low %v1970, %v1986
        %v1990 = vcombine.high %v1970, %v1986
        %v1991 = vpack.c.bf16 %v1987, %v1987
        %v1992 = vpack.c.bf16 %v1988, %v1988
        %v1993 = vpack.c.bf16 %v1989, %v1989
        %v1994 = vpack.c.bf16 %v1990, %v1990
        %v1996 = vsel %vm970, %v1847, 0
        %v1999 = vsel %vm970, %v1919, 0
        %2001 = vmatprep.subr.bf16.mxu0 0
        %2002 = vmatpush1.bf16.xpose.msra.mxu0 0
        %2003 = vmatprep.subr.bf16.mxu0 0
        %2004 = vmatpush1.bf16.xpose.msra.mxu0 0
        %2005 = vmatprep.subr.bf16.mxu0 0
        %2006 = vmatpush1.bf16.xpose.msra.mxu0 0
        %2007 = vmatprep.subr.bf16.mxu0 0
        %2008 = vmatpush1.bf16.xpose.msra.mxu0 0
        %2009 = vmatprep.subr.bf16.mxu0 0
        %2010 = vmatpush1.bf16.xpose.msra.mxu0 0
        %2011 = vmatprep.subr.bf16.mxu0 0
        %2012 = vmatpush1.bf16.xpose.msra.mxu0 0
        %2013 = vmatprep.subr.bf16.mxu0 0
        %2014 = vmatpush1.bf16.xpose.msra.mxu0 0
        %2015 = vmatprep.subr.bf16.mxu0 0
        %2016 = vmatpush1.bf16.xpose.msra.mxu0 %v1999
        %2017 = vmatprep.subr.bf16.mxu0 0
        %2018 = vmatpush2.bf16.xpose.msra.mxu0 0
        %2019 = vmatprep.subr.bf16.mxu0 0
        %2020 = vmatpush2.bf16.xpose.msra.mxu0 0
        %2021 = vmatprep.subr.bf16.mxu0 0
        %2022 = vmatpush2.bf16.xpose.msra.mxu0 0
        %2023 = vmatprep.subr.bf16.mxu0 0
        %2024 = vmatpush2.bf16.xpose.msra.mxu0 0
        %2025 = vmatprep.subr.bf16.mxu0 0
        %2026 = vmatpush2.bf16.xpose.msra.mxu0 0
        %2027 = vmatprep.subr.bf16.mxu0 0
        %2028 = vmatpush2.bf16.xpose.msra.mxu0 0
        %2029 = vmatprep.subr.bf16.mxu0 0
        %2030 = vmatpush2.bf16.xpose.msra.mxu0 0
        %2031 = vmatprep.subr.bf16.mxu0 0
        %2032 = vmatpush2.bf16.xpose.msra.mxu0 0
        %2033 = vmatprep.mubr.bf16.mxu0 0
        %2034 = vmatmul.mubr.bf16.gmra.mxu0 %v1996
        %v2035 = vpop.f32.mrf.mxu0
        %v2036 = vadd.f32 %v515, %v2035
        %v2037 = vpop.f32.mrf.mxu0
        %v2038 = vpop.f32.mrf.mxu0
        %v2039 = vpop.f32.mrf.mxu0
        %2040 = vdwg.mxu0
        %v2042 = vsel %vm970, %v1848, 0
        %v2045 = vsel %vm970, %v1920, 0
        %2047 = vmatprep.subr.bf16.mxu0 0
        %2048 = vmatpush1.bf16.xpose.msra.mxu0 0
        %2049 = vmatprep.subr.bf16.mxu0 0
        %2050 = vmatpush1.bf16.xpose.msra.mxu0 0
        %2051 = vmatprep.subr.bf16.mxu0 0
        %2052 = vmatpush1.bf16.xpose.msra.mxu0 0
        %2053 = vmatprep.subr.bf16.mxu0 0
        %2054 = vmatpush1.bf16.xpose.msra.mxu0 0
        %2055 = vmatprep.subr.bf16.mxu0 0
        %2056 = vmatpush1.bf16.xpose.msra.mxu0 0
        %2057 = vmatprep.subr.bf16.mxu0 0
        %2058 = vmatpush1.bf16.xpose.msra.mxu0 0
        %2059 = vmatprep.subr.bf16.mxu0 0
        %2060 = vmatpush1.bf16.xpose.msra.mxu0 0
        %2061 = vmatprep.subr.bf16.mxu0 0
        %2062 = vmatpush1.bf16.xpose.msra.mxu0 %v2045
        %2063 = vmatprep.subr.bf16.mxu0 0
        %2064 = vmatpush2.bf16.xpose.msra.mxu0 0
        %2065 = vmatprep.subr.bf16.mxu0 0
        %2066 = vmatpush2.bf16.xpose.msra.mxu0 0
        %2067 = vmatprep.subr.bf16.mxu0 0
        %2068 = vmatpush2.bf16.xpose.msra.mxu0 0
        %2069 = vmatprep.subr.bf16.mxu0 0
        %2070 = vmatpush2.bf16.xpose.msra.mxu0 0
        %2071 = vmatprep.subr.bf16.mxu0 0
        %2072 = vmatpush2.bf16.xpose.msra.mxu0 0
        %2073 = vmatprep.subr.bf16.mxu0 0
        %2074 = vmatpush2.bf16.xpose.msra.mxu0 0
        %2075 = vmatprep.subr.bf16.mxu0 0
        %2076 = vmatpush2.bf16.xpose.msra.mxu0 0
        %2077 = vmatprep.subr.bf16.mxu0 0
        %2078 = vmatpush2.bf16.xpose.msra.mxu0 0
        %2079 = vmatprep.mubr.bf16.mxu0 0
        %2080 = vmatmul.mubr.bf16.gmra.mxu0 %v2042
        %v2081 = vpop.f32.mrf.mxu0
        %v2082 = vadd.f32 %v515, %v2081
        %v2083 = vpop.f32.mrf.mxu0
        %v2084 = vpop.f32.mrf.mxu0
        %v2085 = vpop.f32.mrf.mxu0
        %2086 = vdwg.mxu0
        %v2088 = vsel %vm970, %v1849, 0
        %v2091 = vsel %vm970, %v1921, 0
        %2093 = vmatprep.subr.bf16.mxu0 0
        %2094 = vmatpush1.bf16.xpose.msra.mxu0 0
        %2095 = vmatprep.subr.bf16.mxu0 0
        %2096 = vmatpush1.bf16.xpose.msra.mxu0 0
        %2097 = vmatprep.subr.bf16.mxu0 0
        %2098 = vmatpush1.bf16.xpose.msra.mxu0 0
        %2099 = vmatprep.subr.bf16.mxu0 0
        %2100 = vmatpush1.bf16.xpose.msra.mxu0 0
        %2101 = vmatprep.subr.bf16.mxu0 0
        %2102 = vmatpush1.bf16.xpose.msra.mxu0 0
        %2103 = vmatprep.subr.bf16.mxu0 0
        %2104 = vmatpush1.bf16.xpose.msra.mxu0 0
        %2105 = vmatprep.subr.bf16.mxu0 0
        %2106 = vmatpush1.bf16.xpose.msra.mxu0 0
        %2107 = vmatprep.subr.bf16.mxu0 0
        %2108 = vmatpush1.bf16.xpose.msra.mxu0 %v2091
        %2109 = vmatprep.subr.bf16.mxu0 0
        %2110 = vmatpush2.bf16.xpose.msra.mxu0 0
        %2111 = vmatprep.subr.bf16.mxu0 0
        %2112 = vmatpush2.bf16.xpose.msra.mxu0 0
        %2113 = vmatprep.subr.bf16.mxu0 0
        %2114 = vmatpush2.bf16.xpose.msra.mxu0 0
        %2115 = vmatprep.subr.bf16.mxu0 0
        %2116 = vmatpush2.bf16.xpose.msra.mxu0 0
        %2117 = vmatprep.subr.bf16.mxu0 0
        %2118 = vmatpush2.bf16.xpose.msra.mxu0 0
        %2119 = vmatprep.subr.bf16.mxu0 0
        %2120 = vmatpush2.bf16.xpose.msra.mxu0 0
        %2121 = vmatprep.subr.bf16.mxu0 0
        %2122 = vmatpush2.bf16.xpose.msra.mxu0 0
        %2123 = vmatprep.subr.bf16.mxu0 0
        %2124 = vmatpush2.bf16.xpose.msra.mxu0 0
        %2125 = vmatprep.mubr.bf16.mxu0 0
        %2126 = vmatmul.mubr.bf16.gmra.mxu0 %v2088
        %v2127 = vpop.f32.mrf.mxu0
        %v2128 = vadd.f32 %v515, %v2127
        %v2129 = vpop.f32.mrf.mxu0
        %v2130 = vpop.f32.mrf.mxu0
        %v2131 = vpop.f32.mrf.mxu0
        %2132 = vdwg.mxu0
        %v2134 = vsel %vm970, %v1850, 0
        %v2137 = vsel %vm970, %v1922, 0
        %2139 = vmatprep.subr.bf16.mxu0 0
        %2140 = vmatpush1.bf16.xpose.msra.mxu0 0
        %2141 = vmatprep.subr.bf16.mxu0 0
        %2142 = vmatpush1.bf16.xpose.msra.mxu0 0
        %2143 = vmatprep.subr.bf16.mxu0 0
        %2144 = vmatpush1.bf16.xpose.msra.mxu0 0
        %2145 = vmatprep.subr.bf16.mxu0 0
        %2146 = vmatpush1.bf16.xpose.msra.mxu0 0
        %2147 = vmatprep.subr.bf16.mxu0 0
        %2148 = vmatpush1.bf16.xpose.msra.mxu0 0
        %2149 = vmatprep.subr.bf16.mxu0 0
        %2150 = vmatpush1.bf16.xpose.msra.mxu0 0
        %2151 = vmatprep.subr.bf16.mxu0 0
        %2152 = vmatpush1.bf16.xpose.msra.mxu0 0
        %2153 = vmatprep.subr.bf16.mxu0 0
        %2154 = vmatpush1.bf16.xpose.msra.mxu0 %v2137
        %2155 = vmatprep.subr.bf16.mxu0 0
        %2156 = vmatpush2.bf16.xpose.msra.mxu0 0
        %2157 = vmatprep.subr.bf16.mxu0 0
        %2158 = vmatpush2.bf16.xpose.msra.mxu0 0
        %2159 = vmatprep.subr.bf16.mxu0 0
        %2160 = vmatpush2.bf16.xpose.msra.mxu0 0
        %2161 = vmatprep.subr.bf16.mxu0 0
        %2162 = vmatpush2.bf16.xpose.msra.mxu0 0
        %2163 = vmatprep.subr.bf16.mxu0 0
        %2164 = vmatpush2.bf16.xpose.msra.mxu0 0
        %2165 = vmatprep.subr.bf16.mxu0 0
        %2166 = vmatpush2.bf16.xpose.msra.mxu0 0
        %2167 = vmatprep.subr.bf16.mxu0 0
        %2168 = vmatpush2.bf16.xpose.msra.mxu0 0
        %2169 = vmatprep.subr.bf16.mxu0 0
        %2170 = vmatpush2.bf16.xpose.msra.mxu0 0
        %2171 = vmatprep.mubr.bf16.mxu0 0
        %2172 = vmatmul.mubr.bf16.gmra.mxu0 %v2134
        %v2173 = vpop.f32.mrf.mxu0
        %v2174 = vadd.f32 %v515, %v2173
        %v2175 = vpop.f32.mrf.mxu0
        %v2176 = vpop.f32.mrf.mxu0
        %v2177 = vpop.f32.mrf.mxu0
        %2178 = vdwg.mxu0
        %v2179 = vsel %vm970, %v2036, -inf
        %2180 = vmax.xlane.f32.xlu0 %v2179
        %v2181 = vpop.xlane.xlu0 %2180
        %v2182 = vsel %vm970, %v2082, -inf
        %2183 = vmax.xlane.f32.xlu0 %v2182
        %v2184 = vpop.xlane.xlu0 %2183
        %v2185 = vsel %vm970, %v2128, -inf
        %2186 = vmax.xlane.f32.xlu0 %v2185
        %v2187 = vpop.xlane.xlu0 %2186
        %v2188 = vsel %vm970, %v2174, -inf
        %2189 = vmax.xlane.f32.xlu0 %v2188
        %v2190 = vpop.xlane.xlu0 %2189
        %v2191 = vsub.f32 %v2036, %v2181
        %v2192 = vsub.f32 %v2082, %v2184
        %v2193 = vsub.f32 %v2128, %v2187
        %v2194 = vsub.f32 %v2174, %v2190
        %v2195 = vmul.f32 %v2191, 1.442695
        %v2196 = vpow.pop %v2195
        %v2197 = vmul.f32 %v2192, 1.442695
        %v2198 = vpow.pop %v2197
        %v2199 = vmul.f32 %v2193, 1.442695
        %v2200 = vpow.pop %v2199
        %v2201 = vmul.f32 %v2194, 1.442695
        %v2202 = vpow.pop %v2201
        %v2203 = vsel %vm970, %v2196, 0.0
        %2204 = vadd.xlane.f32.xlu0 %v2203
        %v2205 = vpop.xlane.xlu0 %2204
        %v2206 = vsel %vm970, %v2198, 0.0
        %2207 = vadd.xlane.f32.xlu0 %v2206
        %v2208 = vpop.xlane.xlu0 %2207
        %v2209 = vsel %vm970, %v2200, 0.0
        %2210 = vadd.xlane.f32.xlu0 %v2209
        %v2211 = vpop.xlane.xlu0 %2210
        %v2212 = vsel %vm970, %v2202, 0.0
        %2213 = vadd.xlane.f32.xlu0 %v2212
        %v2214 = vpop.xlane.xlu0 %2213
        %v2215 = vrcp.pop %v2205
        %v2216 = vmul.f32 %v2196, %v2215
        %v2217 = vrcp.pop %v2208
        %v2218 = vmul.f32 %v2198, %v2217
        %v2219 = vrcp.pop %v2211
        %v2220 = vmul.f32 %v2200, %v2219
        %v2221 = vrcp.pop %v2214
        %v2222 = vmul.f32 %v2202, %v2221
        %v2223 = vpack.c.bf16 %v2216, %v2216
        %v2224 = vpack.c.bf16 %v2218, %v2218
        %v2225 = vpack.c.bf16 %v2220, %v2220
        %v2226 = vpack.c.bf16 %v2222, %v2222
        %v2228 = vsel %vm970, %v2223, 0
        %v2231 = vsel %vm1206, %v1991, 0
        %2233 = vmatprep.subr.bf16.mxu0 0
        %2234 = vmatpush1.bf16.msra.mxu0 0
        %2235 = vmatprep.subr.bf16.mxu0 0
        %2236 = vmatpush1.bf16.msra.mxu0 0
        %2237 = vmatprep.subr.bf16.mxu0 0
        %2238 = vmatpush1.bf16.msra.mxu0 0
        %2239 = vmatprep.subr.bf16.mxu0 0
        %2240 = vmatpush1.bf16.msra.mxu0 0
        %2241 = vmatprep.subr.bf16.mxu0 0
        %2242 = vmatpush1.bf16.msra.mxu0 0
        %2243 = vmatprep.subr.bf16.mxu0 0
        %2244 = vmatpush1.bf16.msra.mxu0 0
        %2245 = vmatprep.subr.bf16.mxu0 0
        %2246 = vmatpush1.bf16.msra.mxu0 0
        %2247 = vmatprep.subr.bf16.mxu0 0
        %2248 = vmatpush1.bf16.msra.mxu0 %v2231
        %2249 = vmatprep.subr.bf16.mxu0 0
        %2250 = vmatpush2.bf16.msra.mxu0 0
        %2251 = vmatprep.subr.bf16.mxu0 0
        %2252 = vmatpush2.bf16.msra.mxu0 0
        %2253 = vmatprep.subr.bf16.mxu0 0
        %2254 = vmatpush2.bf16.msra.mxu0 0
        %2255 = vmatprep.subr.bf16.mxu0 0
        %2256 = vmatpush2.bf16.msra.mxu0 0
        %2257 = vmatprep.subr.bf16.mxu0 0
        %2258 = vmatpush2.bf16.msra.mxu0 0
        %2259 = vmatprep.subr.bf16.mxu0 0
        %2260 = vmatpush2.bf16.msra.mxu0 0
        %2261 = vmatprep.subr.bf16.mxu0 0
        %2262 = vmatpush2.bf16.msra.mxu0 0
        %2263 = vmatprep.subr.bf16.mxu0 0
        %2264 = vmatpush2.bf16.msra.mxu0 0
        %2265 = vmatprep.mubr.bf16.mxu0 0
        %2266 = vmatmul.mubr.bf16.gmra.mxu0 %v2228
        %v2267 = vpop.f32.mrf.mxu0
        %v2268 = vadd.f32 0.0, %v2267
        %v2269 = vpop.f32.mrf.mxu0
        %v2270 = vpop.f32.mrf.mxu0
        %v2271 = vpop.f32.mrf.mxu0
        %2272 = vdwg.mxu0
        %v2274 = vsel %vm970, %v2224, 0
        %v2277 = vsel %vm1206, %v1992, 0
        %2279 = vmatprep.subr.bf16.mxu0 0
        %2280 = vmatpush1.bf16.msra.mxu0 0
        %2281 = vmatprep.subr.bf16.mxu0 0
        %2282 = vmatpush1.bf16.msra.mxu0 0
        %2283 = vmatprep.subr.bf16.mxu0 0
        %2284 = vmatpush1.bf16.msra.mxu0 0
        %2285 = vmatprep.subr.bf16.mxu0 0
        %2286 = vmatpush1.bf16.msra.mxu0 0
        %2287 = vmatprep.subr.bf16.mxu0 0
        %2288 = vmatpush1.bf16.msra.mxu0 0
        %2289 = vmatprep.subr.bf16.mxu0 0
        %2290 = vmatpush1.bf16.msra.mxu0 0
        %2291 = vmatprep.subr.bf16.mxu0 0
        %2292 = vmatpush1.bf16.msra.mxu0 0
        %2293 = vmatprep.subr.bf16.mxu0 0
        %2294 = vmatpush1.bf16.msra.mxu0 %v2277
        %2295 = vmatprep.subr.bf16.mxu0 0
        %2296 = vmatpush2.bf16.msra.mxu0 0
        %2297 = vmatprep.subr.bf16.mxu0 0
        %2298 = vmatpush2.bf16.msra.mxu0 0
        %2299 = vmatprep.subr.bf16.mxu0 0
        %2300 = vmatpush2.bf16.msra.mxu0 0
        %2301 = vmatprep.subr.bf16.mxu0 0
        %2302 = vmatpush2.bf16.msra.mxu0 0
        %2303 = vmatprep.subr.bf16.mxu0 0
        %2304 = vmatpush2.bf16.msra.mxu0 0
        %2305 = vmatprep.subr.bf16.mxu0 0
        %2306 = vmatpush2.bf16.msra.mxu0 0
        %2307 = vmatprep.subr.bf16.mxu0 0
        %2308 = vmatpush2.bf16.msra.mxu0 0
        %2309 = vmatprep.subr.bf16.mxu0 0
        %2310 = vmatpush2.bf16.msra.mxu0 0
        %2311 = vmatprep.mubr.bf16.mxu0 0
        %2312 = vmatmul.mubr.bf16.gmra.mxu0 %v2274
        %v2313 = vpop.f32.mrf.mxu0
        %v2314 = vadd.f32 0.0, %v2313
        %v2315 = vpop.f32.mrf.mxu0
        %v2316 = vpop.f32.mrf.mxu0
        %v2317 = vpop.f32.mrf.mxu0
        %2318 = vdwg.mxu0
        %v2320 = vsel %vm970, %v2225, 0
        %v2323 = vsel %vm1206, %v1993, 0
        %2325 = vmatprep.subr.bf16.mxu0 0
        %2326 = vmatpush1.bf16.msra.mxu0 0
        %2327 = vmatprep.subr.bf16.mxu0 0
        %2328 = vmatpush1.bf16.msra.mxu0 0
        %2329 = vmatprep.subr.bf16.mxu0 0
        %2330 = vmatpush1.bf16.msra.mxu0 0
        %2331 = vmatprep.subr.bf16.mxu0 0
        %2332 = vmatpush1.bf16.msra.mxu0 0
        %2333 = vmatprep.subr.bf16.mxu0 0
        %2334 = vmatpush1.bf16.msra.mxu0 0
        %2335 = vmatprep.subr.bf16.mxu0 0
        %2336 = vmatpush1.bf16.msra.mxu0 0
        %2337 = vmatprep.subr.bf16.mxu0 0
        %2338 = vmatpush1.bf16.msra.mxu0 0
        %2339 = vmatprep.subr.bf16.mxu0 0
        %2340 = vmatpush1.bf16.msra.mxu0 %v2323
        %2341 = vmatprep.subr.bf16.mxu0 0
        %2342 = vmatpush2.bf16.msra.mxu0 0
        %2343 = vmatprep.subr.bf16.mxu0 0
        %2344 = vmatpush2.bf16.msra.mxu0 0
        %2345 = vmatprep.subr.bf16.mxu0 0
        %2346 = vmatpush2.bf16.msra.mxu0 0
        %2347 = vmatprep.subr.bf16.mxu0 0
        %2348 = vmatpush2.bf16.msra.mxu0 0
        %2349 = vmatprep.subr.bf16.mxu0 0
        %2350 = vmatpush2.bf16.msra.mxu0 0
        %2351 = vmatprep.subr.bf16.mxu0 0
        %2352 = vmatpush2.bf16.msra.mxu0 0
        %2353 = vmatprep.subr.bf16.mxu0 0
        %2354 = vmatpush2.bf16.msra.mxu0 0
        %2355 = vmatprep.subr.bf16.mxu0 0
        %2356 = vmatpush2.bf16.msra.mxu0 0
        %2357 = vmatprep.mubr.bf16.mxu0 0
        %2358 = vmatmul.mubr.bf16.gmra.mxu0 %v2320
        %v2359 = vpop.f32.mrf.mxu0
        %v2360 = vadd.f32 0.0, %v2359
        %v2361 = vpop.f32.mrf.mxu0
        %v2362 = vpop.f32.mrf.mxu0
        %v2363 = vpop.f32.mrf.mxu0
        %2364 = vdwg.mxu0
        %v2366 = vsel %vm970, %v2226, 0
        %v2369 = vsel %vm1206, %v1994, 0
        %2371 = vmatprep.subr.bf16.mxu0 0
        %2372 = vmatpush1.bf16.msra.mxu0 0
        %2373 = vmatprep.subr.bf16.mxu0 0
        %2374 = vmatpush1.bf16.msra.mxu0 0
        %2375 = vmatprep.subr.bf16.mxu0 0
        %2376 = vmatpush1.bf16.msra.mxu0 0
        %2377 = vmatprep.subr.bf16.mxu0 0
        %2378 = vmatpush1.bf16.msra.mxu0 0
        %2379 = vmatprep.subr.bf16.mxu0 0
        %2380 = vmatpush1.bf16.msra.mxu0 0
        %2381 = vmatprep.subr.bf16.mxu0 0
        %2382 = vmatpush1.bf16.msra.mxu0 0
        %2383 = vmatprep.subr.bf16.mxu0 0
        %2384 = vmatpush1.bf16.msra.mxu0 0
        %2385 = vmatprep.subr.bf16.mxu0 0
        %2386 = vmatpush1.bf16.msra.mxu0 %v2369
        %2387 = vmatprep.subr.bf16.mxu0 0
        %2388 = vmatpush2.bf16.msra.mxu0 0
        %2389 = vmatprep.subr.bf16.mxu0 0
        %2390 = vmatpush2.bf16.msra.mxu0 0
        %2391 = vmatprep.subr.bf16.mxu0 0
        %2392 = vmatpush2.bf16.msra.mxu0 0
        %2393 = vmatprep.subr.bf16.mxu0 0
        %2394 = vmatpush2.bf16.msra.mxu0 0
        %2395 = vmatprep.subr.bf16.mxu0 0
        %2396 = vmatpush2.bf16.msra.mxu0 0
        %2397 = vmatprep.subr.bf16.mxu0 0
        %2398 = vmatpush2.bf16.msra.mxu0 0
        %2399 = vmatprep.subr.bf16.mxu0 0
        %2400 = vmatpush2.bf16.msra.mxu0 0
        %2401 = vmatprep.subr.bf16.mxu0 0
        %2402 = vmatpush2.bf16.msra.mxu0 0
        %2403 = vmatprep.mubr.bf16.mxu0 0
        %2404 = vmatmul.mubr.bf16.gmra.mxu0 %v2366
        %v2405 = vpop.f32.mrf.mxu0
        %v2406 = vadd.f32 0.0, %v2405
        %v2407 = vpop.f32.mrf.mxu0
        %v2408 = vpop.f32.mrf.mxu0
        %v2409 = vpop.f32.mrf.mxu0
        %2410 = vdwg.mxu0
        %v2411 = vcombine.low %v2268, %v2360
        %v2412 = vcombine.high %v2268, %v2360
        %v2414 = vunpack.c.l.s4 1983009808
        %v2415 = vunpack.c.0.s8 %v2414
        %v2416 = vlaneseq
        %v2417 = vshrl.u32 %v2416, 7
        %v2418 = vsub.s32 %v2415, %v2417
        %v2419 = vrot.slane %v2411, %v2418
        %v2421 = vunpack.c.l.s4 1983009808
        %v2422 = vunpack.c.0.s8 %v2421
        %v2423 = vlaneseq
        %v2424 = vshrl.u32 %v2423, 7
        %v2425 = vsub.s32 %v2422, %v2424
        %v2426 = vrot.slane %v2412, %v2425
        %v2427 = vcombine.low %v2314, %v2406
        %v2428 = vcombine.high %v2314, %v2406
        %v2430 = vunpack.c.l.s4 1983009808
        %v2431 = vunpack.c.0.s8 %v2430
        %v2432 = vlaneseq
        %v2433 = vshrl.u32 %v2432, 7
        %v2434 = vsub.s32 %v2431, %v2433
        %v2435 = vrot.slane %v2427, %v2434
        %v2437 = vunpack.c.l.s4 1983009808
        %v2438 = vunpack.c.0.s8 %v2437
        %v2439 = vlaneseq
        %v2440 = vshrl.u32 %v2439, 7
        %v2441 = vsub.s32 %v2438, %v2440
        %v2442 = vrot.slane %v2428, %v2441
        %v2443 = vcombine.low %v2419, %v2435
        %v2444 = vcombine.high %v2419, %v2435
        %v2446 = vunpack.c.l.s4 1934713408
        %v2447 = vunpack.c.0.s8 %v2446
        %v2448 = vlaneseq
        %v2449 = vshrl.u32 %v2448, 7
        %v2450 = vsub.s32 %v2447, %v2449
        %v2451 = vrot.slane %v2443, %v2450
        %v2453 = vunpack.c.l.s4 1934713408
        %v2454 = vunpack.c.0.s8 %v2453
        %v2455 = vlaneseq
        %v2456 = vshrl.u32 %v2455, 7
        %v2457 = vsub.s32 %v2454, %v2456
        %v2458 = vrot.slane %v2444, %v2457
        %v2459 = vcombine.low %v2426, %v2442
        %v2460 = vcombine.high %v2426, %v2442
        %v2462 = vunpack.c.l.s4 1934713408
        %v2463 = vunpack.c.0.s8 %v2462
        %v2464 = vlaneseq
        %v2465 = vshrl.u32 %v2464, 7
        %v2466 = vsub.s32 %v2463, %v2465
        %v2467 = vrot.slane %v2459, %v2466
        %v2469 = vunpack.c.l.s4 1934713408
        %v2470 = vunpack.c.0.s8 %v2469
        %v2471 = vlaneseq
        %v2472 = vshrl.u32 %v2471, 7
        %v2473 = vsub.s32 %v2470, %v2472
        %v2474 = vrot.slane %v2460, %v2473
        %v2475 = vcombine.high %v2451, 0.0
        %v2476 = vcombine.high %v2458, 0.0
        %v2477 = vcombine.high %v2467, 0.0
        %v2478 = vcombine.high %v2474, 0.0
        %v2479 = vcombine.low %v2451, %v2458
        %v2481 = vunpack.c.l.s4 1983009808
        %v2482 = vunpack.c.0.s8 %v2481
        %v2483 = vlaneseq
        %v2484 = vshrl.u32 %v2483, 7
        %v2485 = vsub.s32 %v2482, %v2484
        %v2486 = vrot.slane %v2479, %v2485
        %v2487 = vcombine.low %v2475, %v2476
        %v2489 = vunpack.c.l.s4 1983009808
        %v2490 = vunpack.c.0.s8 %v2489
        %v2491 = vlaneseq
        %v2492 = vshrl.u32 %v2491, 7
        %v2493 = vsub.s32 %v2490, %v2492
        %v2494 = vrot.slane %v2487, %v2493
        %v2495 = vcombine.low %v2467, %v2474
        %v2497 = vunpack.c.l.s4 1983009808
        %v2498 = vunpack.c.0.s8 %v2497
        %v2499 = vlaneseq
        %v2500 = vshrl.u32 %v2499, 7
        %v2501 = vsub.s32 %v2498, %v2500
        %v2502 = vrot.slane %v2495, %v2501
        %v2503 = vcombine.low %v2477, %v2478
        %v2505 = vunpack.c.l.s4 1983009808
        %v2506 = vunpack.c.0.s8 %v2505
        %v2507 = vlaneseq
        %v2508 = vshrl.u32 %v2507, 7
        %v2509 = vsub.s32 %v2506, %v2508
        %v2510 = vrot.slane %v2503, %v2509
        %v2511 = vcombine.low %v2486, %v2494
        %v2512 = vcombine.high %v2486, %v2494
        %v2514 = vunpack.c.l.s4 1934713408
        %v2515 = vunpack.c.0.s8 %v2514
        %v2516 = vlaneseq
        %v2517 = vshrl.u32 %v2516, 7
        %v2518 = vsub.s32 %v2515, %v2517
        %v2519 = vrot.slane %v2511, %v2518
        %v2521 = vunpack.c.l.s4 1934713408
        %v2522 = vunpack.c.0.s8 %v2521
        %v2523 = vlaneseq
        %v2524 = vshrl.u32 %v2523, 7
        %v2525 = vsub.s32 %v2522, %v2524
        %v2526 = vrot.slane %v2512, %v2525
        %v2527 = vcombine.low %v2502, %v2510
        %v2528 = vcombine.high %v2502, %v2510
        %v2530 = vunpack.c.l.s4 1934713408
        %v2531 = vunpack.c.0.s8 %v2530
        %v2532 = vlaneseq
        %v2533 = vshrl.u32 %v2532, 7
        %v2534 = vsub.s32 %v2531, %v2533
        %v2535 = vrot.slane %v2527, %v2534
        %v2537 = vunpack.c.l.s4 1934713408
        %v2538 = vunpack.c.0.s8 %v2537
        %v2539 = vlaneseq
        %v2540 = vshrl.u32 %v2539, 7
        %v2541 = vsub.s32 %v2538, %v2540
        %v2542 = vrot.slane %v2528, %v2541
        %v2543 = vcombine.low %v2519, %v2535
        %v2544 = vcombine.high %v2519, %v2535
        %v2545 = vcombine.low %v2526, %v2542
        %v2546 = vcombine.high %v2526, %v2542
        %2548 = vrot.lane.b32.xlu0 %v2544, 8
        %v2549 = vpop.permute.xlu0 %2548
        %2552 = vrot.lane.b32.xlu0 %v2545, 16
        %v2553 = vpop.permute.xlu0 %2552
        %2556 = vrot.lane.b32.xlu0 %v2546, 24
        %v2557 = vpop.permute.xlu0 %2556
        %v2559 = vsel %vm970, %v2543, %v2549
        %v2560 = vsel %vm1537, %v2559, %v2553
        %v2561 = vsel %vm1539, %v2560, %v2557
        %v2562 = vpack.c.bf16 %v2561, %v1540
        %v2563 = vld [vmem:[%s377] sm:$0xf]
        %v2564 = vld [vmem:[%s377 + $0x4] sm:$0xf]
        %v2565 = vld [vmem:[%s377 + $0x8] sm:$0xf]
        %v2566 = vld [vmem:[%s377 + $0xc] sm:$0xf]
        %v2567 = vlaneseq
        %v2568 = vshrl.u32 %v2567, 7
        %v2569 = vsub.s32 4, %v2568
        %v2570 = vrot.slane %v408, %v2569
        %v2575 = vunpack.c.l.b16 %v2563
        %v2576 = vunpack.c.l.b16 %v2564
        %v2577 = vunpack.c.l.b16 %v2565
        %v2578 = vunpack.c.l.b16 %v2566
        %v2579 = vpack.c.b16 %v2576, %v2575
        %v2580 = vpack.c.b16 %v2578, %v2577
        %v2584 = vsel %vm409, %v2562, 0
        %2586 = vmatprep.subr.bf16.mxu0 0
        %2587 = vmatpush1.bf16.msra.mxu0 0
        %2588 = vmatprep.subr.bf16.mxu0 0
        %2589 = vmatpush1.bf16.msra.mxu0 0
        %2590 = vmatprep.subr.bf16.mxu0 0
        %2591 = vmatpush1.bf16.msra.mxu0 0
        %2592 = vmatprep.subr.bf16.mxu0 0
        %2593 = vmatpush1.bf16.msra.mxu0 0
        %2594 = vmatprep.subr.bf16.mxu0 0
        %2595 = vmatpush1.bf16.msra.mxu0 0
        %2596 = vmatprep.subr.bf16.mxu0 0
        %2597 = vmatpush1.bf16.msra.mxu0 0
        %2598 = vmatprep.subr.bf16.mxu0 0
        %2599 = vmatpush1.bf16.msra.mxu0 %v2580
        %2600 = vmatprep.subr.bf16.mxu0 0
        %2601 = vmatpush1.bf16.msra.mxu0 %v2579
        %2602 = vmatprep.subr.bf16.mxu0 0
        %2603 = vmatpush2.bf16.msra.mxu0 0
        %2604 = vmatprep.subr.bf16.mxu0 0
        %2605 = vmatpush2.bf16.msra.mxu0 0
        %2606 = vmatprep.subr.bf16.mxu0 0
        %2607 = vmatpush2.bf16.msra.mxu0 0
        %2608 = vmatprep.subr.bf16.mxu0 0
        %2609 = vmatpush2.bf16.msra.mxu0 0
        %2610 = vmatprep.subr.bf16.mxu0 0
        %2611 = vmatpush2.bf16.msra.mxu0 0
        %2612 = vmatprep.subr.bf16.mxu0 0
        %2613 = vmatpush2.bf16.msra.mxu0 0
        %2614 = vmatprep.subr.bf16.mxu0 0
        %2615 = vmatpush2.bf16.msra.mxu0 0
        %2616 = vmatprep.subr.bf16.mxu0 0
        %2617 = vmatpush2.bf16.msra.mxu0 0
        %2618 = vmatprep.mubr.bf16.mxu0 0
        %2619 = vmatmul.mubr.bf16.gmra.mxu0 %v2584
        %v2620 = vpop.f32.mrf.mxu0
        %v2621 = vadd.f32 %v2570, %v2620
        %v2622 = vpop.f32.mrf.mxu0
        %v2623 = vpop.f32.mrf.mxu0
        %v2624 = vadd.f32 %v2570, %v2623
        %v2625 = vpop.f32.mrf.mxu0
        %2626 = vdwg.mxu0
        %v2627 = vadd.f32 %v406, %v2621
        %v2628 = vadd.f32 %v407, %v2624
        %v2629 = vsel %vm409, %v2627, 0.0
        %2630 = vadd.xlane.f32.xlu0 %v2629
        %v2631 = vpop.xlane.xlu0 %2630
        %v2632 = vsel %vm409, %v2628, 0.0
        %2633 = vadd.xlane.f32.xlu0 %v2632
        %v2634 = vpop.xlane.xlu0 %2633
        %v2635 = vmul.f32 %v2631, %v416
        %v2636 = vmul.f32 %v2634, %v416
        %v2637 = vsub.f32 %v2627, %v2635
        %v2638 = vsub.f32 %v2628, %v2636
        %v2639 = vmul.f32 %v2637, %v2637
        %v2640 = vmul.f32 %v2638, %v2638
        %v2641 = vsel %vm409, %v2639, 0.0
        %2642 = vadd.xlane.f32.xlu0 %v2641
        %v2643 = vpop.xlane.xlu0 %2642
        %v2644 = vsel %vm409, %v2640, 0.0
        %2645 = vadd.xlane.f32.xlu0 %v2644
        %v2646 = vpop.xlane.xlu0 %2645
        %v2647 = vmul.f32 %v2643, %v416
        %v2648 = vmul.f32 %v2646, %v416
        %v2649 = vadd.f32 %v2647, 1e-05
        %v2650 = vadd.f32 %v2648, 1e-05
        %v2651 = vrsqrt.pop %v2649
        %v2652 = vrsqrt.pop %v2650
        %v2653 = vmul.f32 %v2637, %v2651
        %v2654 = vmul.f32 %v2638, %v2652
        %v2655 = vlaneseq
        %v2656 = vshrl.u32 %v2655, 7
        %v2657 = vsub.s32 2, %v2656
        %v2658 = vrot.slane %v408, %v2657
        %v2659 = vmul.f32 %v2653, %v2658
        %v2660 = vmul.f32 %v2654, %v2658
        %v2661 = vlaneseq
        %v2662 = vshrl.u32 %v2661, 7
        %v2663 = vsub.s32 3, %v2662
        %v2664 = vrot.slane %v408, %v2663
        %v2665 = vadd.f32 %v2659, %v2664
        %v2666 = vadd.f32 %v2660, %v2664
        %v2667 = vpack.c.bf16 %v2666, %v2665
        %v2668 = vld [vmem:[%s382] sm:$0xf]
        %v2669 = vld [vmem:[%s382 + $0x4] sm:$0xf]
        %v2670 = vld [vmem:[%s382 + $0x8] sm:$0xf]
        %v2671 = vld [vmem:[%s382 + $0xc] sm:$0xf]
        %v2672 = vld [vmem:[%s394] sm:$0x1]
        %v2674 = vlaneseq
        %v2675 = vshrl.u32 %v2674, 7
        %v2676 = vsub.s32 0, %v2675
        %v2677 = vrot.slane %v2672, %v2676
        %v2683 = vunpack.c.l.b16 %v2668
        %v2684 = vunpack.c.l.b16 %v2669
        %v2685 = vunpack.c.l.b16 %v2670
        %v2686 = vunpack.c.l.b16 %v2671
        %v2687 = vpack.c.b16 %v2684, %v2683
        %v2688 = vpack.c.b16 %v2686, %v2685
        %v2692 = vsel %vm409, %v2667, 0
        %2694 = vmatprep.subr.bf16.mxu0 0
        %2695 = vmatpush1.bf16.msra.mxu0 0
        %2696 = vmatprep.subr.bf16.mxu0 0
        %2697 = vmatpush1.bf16.msra.mxu0 0
        %2698 = vmatprep.subr.bf16.mxu0 0
        %2699 = vmatpush1.bf16.msra.mxu0 0
        %2700 = vmatprep.subr.bf16.mxu0 0
        %2701 = vmatpush1.bf16.msra.mxu0 0
        %2702 = vmatprep.subr.bf16.mxu0 0
        %2703 = vmatpush1.bf16.msra.mxu0 0
        %2704 = vmatprep.subr.bf16.mxu0 0
        %2705 = vmatpush1.bf16.msra.mxu0 0
        %2706 = vmatprep.subr.bf16.mxu0 0
        %2707 = vmatpush1.bf16.msra.mxu0 %v2688
        %2708 = vmatprep.subr.bf16.mxu0 0
        %2709 = vmatpush1.bf16.msra.mxu0 %v2687
        %2710 = vmatprep.subr.bf16.mxu0 0
        %2711 = vmatpush2.bf16.msra.mxu0 0
        %2712 = vmatprep.subr.bf16.mxu0 0
        %2713 = vmatpush2.bf16.msra.mxu0 0
        %2714 = vmatprep.subr.bf16.mxu0 0
        %2715 = vmatpush2.bf16.msra.mxu0 0
        %2716 = vmatprep.subr.bf16.mxu0 0
        %2717 = vmatpush2.bf16.msra.mxu0 0
        %2718 = vmatprep.subr.bf16.mxu0 0
        %2719 = vmatpush2.bf16.msra.mxu0 0
        %2720 = vmatprep.subr.bf16.mxu0 0
        %2721 = vmatpush2.bf16.msra.mxu0 0
        %2722 = vmatprep.subr.bf16.mxu0 0
        %2723 = vmatpush2.bf16.msra.mxu0 0
        %2724 = vmatprep.subr.bf16.mxu0 0
        %2725 = vmatpush2.bf16.msra.mxu0 0
        %2726 = vmatprep.mubr.bf16.mxu0 0
        %2727 = vmatmul.mubr.bf16.gmra.mxu0 %v2692
        %v2728 = vpop.f32.mrf.mxu0
        %v2729 = vadd.f32 %v2677, %v2728
        %v2730 = vpop.f32.mrf.mxu0
        %v2731 = vpop.f32.mrf.mxu0
        %v2732 = vadd.f32 %v2677, %v2731
        %v2733 = vpop.f32.mrf.mxu0
        %2734 = vdwg.mxu0
        %v2735 = vmax.f32 %v2729, 0.0
        %v2736 = vmax.f32 %v2732, 0.0
        %v2737 = vpack.c.bf16 %v2736, %v2735
        %v2738 = vld [vmem:[%s387] sm:$0xf]
        %v2739 = vld [vmem:[%s387 + $0x4] sm:$0xf]
        %v2740 = vld [vmem:[%s387 + $0x8] sm:$0xf]
        %v2741 = vld [vmem:[%s387 + $0xc] sm:$0xf]
        %v2742 = vld [vmem:[%s387 + $0x10] sm:$0xf]
        %v2743 = vld [vmem:[%s387 + $0x14] sm:$0xf]
        %v2744 = vld [vmem:[%s387 + $0x18] sm:$0xf]
        %v2745 = vld [vmem:[%s387 + $0x1c] sm:$0xf]
        %v2746 = vld [vmem:[%s387 + $0x20] sm:$0xf]
        %v2747 = vld [vmem:[%s387 + $0x24] sm:$0xf]
        %v2748 = vld [vmem:[%s387 + $0x28] sm:$0xf]
        %v2749 = vld [vmem:[%s387 + $0x2c] sm:$0xf]
        %v2750 = vld [vmem:[%s387 + $0x30] sm:$0xf]
        %v2751 = vld [vmem:[%s387 + $0x34] sm:$0xf]
        %v2752 = vld [vmem:[%s387 + $0x38] sm:$0xf]
        %v2753 = vld [vmem:[%s387 + $0x3c] sm:$0xf]
        %v2754 = vlaneseq
        %v2755 = vshrl.u32 %v2754, 7
        %v2756 = vsub.s32 5, %v2755
        %v2757 = vrot.slane %v408, %v2756
        %v2774 = vunpack.c.l.b16 %v2738
        %v2775 = vunpack.c.l.b16 %v2739
        %v2776 = vunpack.c.l.b16 %v2740
        %v2777 = vunpack.c.l.b16 %v2741
        %v2778 = vunpack.c.l.b16 %v2742
        %v2779 = vunpack.c.l.b16 %v2743
        %v2780 = vunpack.c.l.b16 %v2744
        %v2781 = vunpack.c.l.b16 %v2745
        %v2782 = vunpack.c.l.b16 %v2746
        %v2783 = vunpack.c.l.b16 %v2747
        %v2784 = vunpack.c.l.b16 %v2748
        %v2785 = vunpack.c.l.b16 %v2749
        %v2786 = vunpack.c.l.b16 %v2750
        %v2787 = vunpack.c.l.b16 %v2751
        %v2788 = vunpack.c.l.b16 %v2752
        %v2789 = vunpack.c.l.b16 %v2753
        %v2790 = vpack.c.b16 %v2775, %v2774
        %v2791 = vpack.c.b16 %v2777, %v2776
        %v2792 = vpack.c.b16 %v2779, %v2778
        %v2793 = vpack.c.b16 %v2781, %v2780
        %v2794 = vpack.c.b16 %v2783, %v2782
        %v2795 = vpack.c.b16 %v2785, %v2784
        %v2796 = vpack.c.b16 %v2787, %v2786
        %v2797 = vpack.c.b16 %v2789, %v2788
        %2806 = vmatprep.subr.bf16.mxu0 0
        %2807 = vmatpush1.bf16.msra.mxu0 %v2797
        %2808 = vmatprep.subr.bf16.mxu0 0
        %2809 = vmatpush1.bf16.msra.mxu0 %v2796
        %2810 = vmatprep.subr.bf16.mxu0 0
        %2811 = vmatpush1.bf16.msra.mxu0 %v2795
        %2812 = vmatprep.subr.bf16.mxu0 0
        %2813 = vmatpush1.bf16.msra.mxu0 %v2794
        %2814 = vmatprep.subr.bf16.mxu0 0
        %2815 = vmatpush1.bf16.msra.mxu0 %v2793
        %2816 = vmatprep.subr.bf16.mxu0 0
        %2817 = vmatpush1.bf16.msra.mxu0 %v2792
        %2818 = vmatprep.subr.bf16.mxu0 0
        %2819 = vmatpush1.bf16.msra.mxu0 %v2791
        %2820 = vmatprep.subr.bf16.mxu0 0
        %2821 = vmatpush1.bf16.msra.mxu0 %v2790
        %2822 = vmatprep.subr.bf16.mxu0 0
        %2823 = vmatpush2.bf16.msra.mxu0 0
        %2824 = vmatprep.subr.bf16.mxu0 0
        %2825 = vmatpush2.bf16.msra.mxu0 0
        %2826 = vmatprep.subr.bf16.mxu0 0
        %2827 = vmatpush2.bf16.msra.mxu0 0
        %2828 = vmatprep.subr.bf16.mxu0 0
        %2829 = vmatpush2.bf16.msra.mxu0 0
        %2830 = vmatprep.subr.bf16.mxu0 0
        %2831 = vmatpush2.bf16.msra.mxu0 0
        %2832 = vmatprep.subr.bf16.mxu0 0
        %2833 = vmatpush2.bf16.msra.mxu0 0
        %2834 = vmatprep.subr.bf16.mxu0 0
        %2835 = vmatpush2.bf16.msra.mxu0 0
        %2836 = vmatprep.subr.bf16.mxu0 0
        %2837 = vmatpush2.bf16.msra.mxu0 0
        %2838 = vmatprep.mubr.bf16.mxu0 0
        %2839 = vmatmul.mubr.bf16.gmra.mxu0 %v2737
        %v2840 = vpop.f32.mrf.mxu0
        %v2841 = vadd.f32 %v2757, %v2840
        %v2842 = vpop.f32.mrf.mxu0
        %v2843 = vpop.f32.mrf.mxu0
        %v2844 = vadd.f32 %v2757, %v2843
        %v2845 = vpop.f32.mrf.mxu0
        %2846 = vdwg.mxu0
        %v2847 = vadd.f32 %v2627, %v2841
        %v2848 = vadd.f32 %v2628, %v2844
        %2849 = vst.msk [vmem:[#allocation2] sm:$0xff] %vm409, %v2847
        %2850 = vst.msk [vmem:[#allocation2 + $0x8] sm:$0xff] %vm409, %v2848
        %p2851 = scmp.eq.s32.totalorder %s24, 1
        // Predicated region
        $region53: #{tpu_custom_call.1} parent=47 // pred_check
          %p2852 = pneg %p2851
        $region54: #{tpu_custom_call.1} parent=47 // pred_check_branch
          %2854 = sbr.rel (%p2852) target = $region56
        $region55: #{tpu_custom_call.1} parent=47 // pred_region
          %2855 = vst.msk [vmem:[#allocation3] sm:$0xff] %vm409, %v2847
          %2856 = vst.msk [vmem:[#allocation3 + $0x8] sm:$0xff] %vm409, %v2848
        $region56: #{tpu_custom_call.1} parent=47 // pred_fallthru
          _
        // Predicated region
        $region57: #{tpu_custom_call.1} parent=47 // pred_check
          %p2857 = pneg %p231
        $region58: #{tpu_custom_call.1} parent=47 // pred_check_branch
          %2859 = sbr.rel (%p2857) target = $region60
        $region59: #{tpu_custom_call.1} parent=47 // pred_region
          %s2860 = smul.u32 2, %s23
          %s2862 = ssub.s32 256, 256
          %2863 = vsyncadd [#allocation4], %s2862
          %s2864 = smul.addr %s2860, 128
          %s2865 = scalar_lea.hbm %s7, %s2864
          %s2866 = sshll.u32 [#allocation3], 4
          %s2867 = int_to_ptr.vmem [resolvable:$true] %s2866
          %2872 = dma.vmem_to_hbm [thread:$0]  %s2867, 256, %s2865, [#allocation4], 128, 128, 8
        $region60: #{tpu_custom_call.1} parent=47 // pred_fallthru
          _
        // Predicated region
        $region61: #{tpu_custom_call.1} parent=47 // pred_check
          %p2873 = pneg %p231
        $region62: #{tpu_custom_call.1} parent=47 // pred_check_branch
          %2875 = sbr.rel (%p2873) target = $region64
        $region63: #{tpu_custom_call.1} parent=47 // pred_region
          %2876 = dma.done [#allocation4], 256
        $region64: #{tpu_custom_call.1} parent=47 // pred_fallthru
          _
      $region48: #{tpu_custom_call.1} parent=5 // pred_fallthru
        _
      %p2877 = scmp.le.s32.totalorder 2, %s14
      // Predicated region
      $region65: #{tpu_custom_call.1} parent=5 // pred_check
        %p2878 = pneg %p2877
      $region66: #{tpu_custom_call.1} parent=5 // pred_check_branch
        %2880 = sbr.rel (%p2878) target = $region68
      $region67: #{tpu_custom_call.1} parent=5 // pred_region
        %s2881 = ssub.s32 %s14, 2
      $region68: #{tpu_custom_call.1} parent=5 // pred_fallthru
        _
    $region6: #{tpu_custom_call.1} parent=1 // loop_footer
      %s18 = sadd.s32 1, %s14
    $region7: #{tpu_custom_call.1} parent=1 // loop_footer_branch
      %13 = sbr.rel target = $region3
    $region8: #{tpu_custom_call.1} parent=1 // loop_exit
      _
    %2882 = vsyncpa [#allocation4], 1
    %s2883 = scalar_lea.sflag [#allocation4], 1
    %2884 = vsyncpa %s2883, 1

</llo_original>
